<compile_context>
chip_gen: v6e
topology: v6e:2x2x1
jax: 0.10.0
libtpu: 0.0.40
codegen_flags: <defaults>
</compile_context>

<pallas_src>
import math
import functools

import jax
import jax.numpy as jnp
from jax.experimental import pallas as pl
from jax.experimental.pallas import tpu as pltpu

EPS = 1e-5  # nn.LayerNorm default eps


def _mab_kernel(x_ref, ln_g_ref, ln_b_ref, wqkv_ref, bqkv_ref,
                wout_ref, bout_ref,
                out_ref, qkv_out_ref,
                acc_ref,
                *, heads, head_size):
    x = x_ref[0]                                   # (N, C) f32, residual input
    C = heads * head_size
    scale = 1.0 / math.sqrt(head_size)

    # ---- LayerNorm (f32, biased variance, like PyTorch) ----
    mean = jnp.mean(x, axis=-1, keepdims=True)
    var = jnp.mean((x - mean) ** 2, axis=-1, keepdims=True)
    xn = (x - mean) * jax.lax.rsqrt(var + EPS)
    xn = xn * ln_g_ref[0] + ln_b_ref[0]

    # ---- QKV projection: one lane-dense bf16 matmul, f32 accumulation ----
    # Weight columns are pre-permuted to [q_h0..q_h{H-1} | k_... | v_...].
    qkv = jnp.dot(xn.astype(jnp.bfloat16), wqkv_ref[...],
                  preferred_element_type=jnp.float32) + bqkv_ref[0]   # (N, 3C)

    # Single lane-dense store; (B, H, N, Hd) reshape happens in the wrapper.
    qkv_out_ref[0] = qkv

    # ---- Attention: per-head, accumulate output projection into scratch ----
    for h in range(heads):                         # small static unroll
        lo = h * head_size
        # fold 1/sqrt(Hd) into q (N, Hd) rather than scaling the (N, N) scores
        qh = (qkv[:, lo:lo + head_size] * scale).astype(jnp.bfloat16)     # (N, Hd)
        kh = qkv[:, C + lo:C + lo + head_size].astype(jnp.bfloat16)       # (N, Hd)
        vh = qkv[:, 2 * C + lo:2 * C + lo + head_size].astype(jnp.bfloat16)

        att = jnp.dot(qh, kh.T, preferred_element_type=jnp.float32)       # (N, N)
        att = att - jnp.max(att, axis=-1, keepdims=True)
        p = jnp.exp(att)                                                  # f32
        inv_l = pl.reciprocal(jnp.sum(p, axis=-1, keepdims=True), approx=True)
        # Fold 1/sum into the (N, Hd) context rather than dividing the (N, N) probs.
        ctx_h = jnp.dot(p.astype(jnp.bfloat16), vh,
                        preferred_element_type=jnp.float32) * inv_l       # (N, Hd)
        # Accumulate the output projection (W_out row slice is 8-sublane aligned).
        proj_h = jnp.dot(ctx_h.astype(jnp.bfloat16),
                         wout_ref[lo:lo + head_size, :],
                         preferred_element_type=jnp.float32)              # (N, C)
        if h == 0:
            acc_ref[...] = proj_h                 # first head initializes (no zero pass)
        else:
            acc_ref[...] += proj_h
        # TODO(synk): nn.Dropout(p=0.3) is identity in eval mode; not applied here.

    out_ref[0] = acc_ref[...] + bout_ref[0] + x    # bias + residual


def multi_attention_block(x, ln_g, ln_b, w_qkv, b_qkv, w_out, b_out, heads):
    """x: (B, N, C) f32.  Parameters in the torch layout:
       w_qkv (3C, C), b_qkv (3C,), w_out (C, C), b_out (C,)."""
    B, N, C = x.shape
    Hd = C // heads

    # Absorb torch's view(B, N, H, Hd, 3) feature permutation into the QKV weight
    # columns so the kernel sees a head-major [q | k | v] column layout.
    perm = jnp.array(
        [h * Hd * 3 + d * 3 + s
         for s in range(3) for h in range(heads) for d in range(Hd)],
        dtype=jnp.int32)
    w_qkv_t = w_qkv.T[:, perm].astype(jnp.bfloat16)        # (C, 3C) bf16
    b_qkv_p = b_qkv[perm].reshape(1, 3 * C)                # f32
    w_out_t = w_out.T.astype(jnp.bfloat16)                 # (C, C) bf16 (right-multiply)

    kernel = functools.partial(_mab_kernel, heads=heads, head_size=Hd)

    out_shape = (
        jax.ShapeDtypeStruct((B, N, C), jnp.float32),       # x_out
        jax.ShapeDtypeStruct((B, N, 3 * C), jnp.float32),   # lane-dense qkv
    )

    grid_spec = pltpu.PrefetchScalarGridSpec(
        num_scalar_prefetch=0,
        grid=(B,),
        in_specs=[
            pl.BlockSpec((1, N, C), lambda b: (b, 0, 0)),    # x
            pl.BlockSpec((1, C), lambda b: (0, 0)),          # ln gamma
            pl.BlockSpec((1, C), lambda b: (0, 0)),          # ln beta
            pl.BlockSpec((C, 3 * C), lambda b: (0, 0)),      # W_qkv (bf16)
            pl.BlockSpec((1, 3 * C), lambda b: (0, 0)),      # b_qkv
            pl.BlockSpec((C, C), lambda b: (0, 0)),          # W_out (bf16)
            pl.BlockSpec((1, C), lambda b: (0, 0)),          # b_out
        ],
        out_specs=[
            pl.BlockSpec((1, N, C), lambda b: (b, 0, 0)),
            pl.BlockSpec((1, N, 3 * C), lambda b: (b, 0, 0)),
        ],
        scratch_shapes=[pltpu.VMEM((N, C), jnp.float32)],    # output-proj accumulator
    )

    # Explicit VMEM budget: double-buffered ins/outs + scratch, with headroom.
    est = 2 * (4 * N * C            # x block (f32)
               + 2 * 4 * C          # ln params
               + 2 * C * 3 * C      # W_qkv (bf16)
               + 4 * 3 * C          # b_qkv
               + 2 * C * C          # W_out (bf16)
               + 4 * C              # b_out
               + 4 * N * C          # out block
               + 4 * N * 3 * C)     # qkv out block
    est += 4 * N * C                # accumulator scratch
    vmem_limit = int(min(64 * 1024 * 1024, max(32 * 1024 * 1024, 2 * est)))

    out, qkv_all = pl.pallas_call(
        kernel,
        out_shape=out_shape,
        grid_spec=grid_spec,
        compiler_params=pltpu.CompilerParams(
            dimension_semantics=("parallel",),
            vmem_limit_bytes=vmem_limit),
    )(x, ln_g.reshape(1, C), ln_b.reshape(1, C), w_qkv_t, b_qkv_p,
      w_out_t, b_out.reshape(1, C))

    # Layout plumbing in plain XLA: (B, N, 3C) head-major -> (3, B, H, N, Hd).
    qkv5 = qkv_all.reshape(B, N, 3, heads, Hd).transpose(2, 0, 3, 1, 4)
    q, k, v = qkv5[0], qkv5[1], qkv5[2]
    return out, q, k, v


def ref_forward(x, ln_g, ln_b, w_qkv, b_qkv, w_out, b_out, heads):
    """Pure-JAX f32 reference mirroring the PyTorch module exactly (eval mode)."""
    B, N, C = x.shape
    Hd = C // heads
    mean = x.mean(-1, keepdims=True)
    var = ((x - mean) ** 2).mean(-1, keepdims=True)
    xn = (x - mean) / jnp.sqrt(var + EPS) * ln_g + ln_b
    qkv = xn @ w_qkv.T + b_qkv                                   # (B, N, 3C)
    qkv = qkv.reshape(B, N, heads, Hd, 3).transpose(4, 0, 2, 1, 3)
    q, k, v = qkv[0], qkv[1], qkv[2]                             # (B, H, N, Hd)
    attn = (q @ jnp.swapaxes(k, -1, -2)) / math.sqrt(Hd)
    attn = jax.nn.softmax(attn, axis=-1)
    o = (attn @ v).transpose(0, 2, 1, 3).reshape(B, N, C)
    o = o @ w_out.T + b_out
    return o + x, q, k, v


if __name__ == "__main__":
    B, N, C, H = 2, 8, 32, 4
    Hd = C // H

    key = jax.random.PRNGKey(0)
    k_x, k_lg, k_lb, k_wq, k_bq, k_wo, k_bo = jax.random.split(key, 7)

    x = jax.random.normal(k_x, (B, N, C), dtype=jnp.float32)

    # Deterministic "torch-layout" parameters.
    ln_g = 1.0 + 0.02 * jax.random.normal(k_lg, (C,), dtype=jnp.float32)
    ln_b = 0.02 * jax.random.normal(k_lb, (C,), dtype=jnp.float32)
    w_qkv = jax.random.normal(k_wq, (3 * C, C), dtype=jnp.float32) * (1.0 / math.sqrt(C))
    b_qkv = 0.02 * jax.random.normal(k_bq, (3 * C,), dtype=jnp.float32)
    w_out = jax.random.normal(k_wo, (C, C), dtype=jnp.float32) * (1.0 / math.sqrt(C))
    b_out = 0.02 * jax.random.normal(k_bo, (C,), dtype=jnp.float32)

    out, q, kk, v = multi_attention_block(
        x, ln_g, ln_b, w_qkv, b_qkv, w_out, b_out, H)
    jax.block_until_ready((out, q, kk, v))

    out_r, q_r, k_r, v_r = ref_forward(x, ln_g, ln_b, w_qkv, b_qkv, w_out, b_out, H)

    # Tolerances loosened vs the f32 reference because matmul operands are bf16
    # (f32 accumulation) and the softmax reciprocal is the approx EUP variant.
    assert jnp.allclose(q, q_r, atol=2e-2, rtol=2e-2), "q mismatch"
    assert jnp.allclose(kk, k_r, atol=2e-2, rtol=2e-2), "k mismatch"
    assert jnp.allclose(v, v_r, atol=2e-2, rtol=2e-2), "v mismatch"
    assert jnp.allclose(out, out_r, atol=5e-2, rtol=5e-2), "output mismatch"

    print("KERNEL_OK")
</pallas_src>

<mosaic_0001>
module attributes {stable_mosaic.version = 11 : i64} {
  func.func @_mab_kernel(%arg0: i32, %arg1: memref<1x8x32xf32, #tpu.memory_space<vmem>>, %arg2: memref<1x32xf32, #tpu.memory_space<vmem>>, %arg3: memref<1x32xf32, #tpu.memory_space<vmem>>, %arg4: memref<32x96xbf16, #tpu.memory_space<vmem>>, %arg5: memref<1x96xf32, #tpu.memory_space<vmem>>, %arg6: memref<32x32xbf16, #tpu.memory_space<vmem>>, %arg7: memref<1x32xf32, #tpu.memory_space<vmem>>, %arg8: memref<1x8x32xf32, #tpu.memory_space<vmem>>, %arg9: memref<1x8x96xf32, #tpu.memory_space<vmem>>, %arg10: memref<8x32xf32, #tpu.memory_space<vmem>>) attributes {dimension_semantics = [#tpu.dimension_semantics<parallel>], iteration_bounds = array<i64: 2>, scalar_prefetch = 0 : i64, scratch_operands = 1 : i64, tpu.core_type = #tpu.core_type<tc>, window_params = [{transform_indices = @transform_0, window_bounds = array<i64: 1, 8, 32>}, {pipeline_mode = #tpu.pipeline_mode<synchronous>, transform_indices = @transform_1, window_bounds = array<i64: 1, 32>}, {pipeline_mode = #tpu.pipeline_mode<synchronous>, transform_indices = @transform_2, window_bounds = array<i64: 1, 32>}, {pipeline_mode = #tpu.pipeline_mode<synchronous>, transform_indices = @transform_3, window_bounds = array<i64: 32, 96>}, {pipeline_mode = #tpu.pipeline_mode<synchronous>, transform_indices = @transform_4, window_bounds = array<i64: 1, 96>}, {pipeline_mode = #tpu.pipeline_mode<synchronous>, transform_indices = @transform_5, window_bounds = array<i64: 32, 32>}, {pipeline_mode = #tpu.pipeline_mode<synchronous>, transform_indices = @transform_6, window_bounds = array<i64: 1, 32>}, {transform_indices = @transform_7, window_bounds = array<i64: 1, 8, 32>}, {transform_indices = @transform_8, window_bounds = array<i64: 1, 8, 96>}]} {
    %c0 = arith.constant 0 : index
    %c0_0 = arith.constant 0 : index
    %c0_1 = arith.constant 0 : index
    %0 = vector.load %arg1[%c0, %c0_0, %c0_1] : memref<1x8x32xf32, #tpu.memory_space<vmem>>, vector<1x8x32xf32>
    %1 = vector.shape_cast %0 : vector<1x8x32xf32> to vector<8x32xf32>
    %cst = arith.constant dense<0.000000e+00> : vector<8xf32>
    %2 = vector.multi_reduction <add>, %1, %cst [1] : vector<8x32xf32> to vector<8xf32>
    %3 = vector.shape_cast %2 : vector<8xf32> to vector<8x1xf32>
    %cst_2 = arith.constant 3.200000e+01 : f32
    %4 = vector.broadcast %cst_2 : f32 to vector<8x1xf32>
    %5 = arith.divf %3, %4 : vector<8x1xf32>
    %6 = vector.broadcast %5 : vector<8x1xf32> to vector<8x32xf32>
    %7 = arith.subf %1, %6 : vector<8x32xf32>
    %8 = arith.mulf %7, %7 : vector<8x32xf32>
    %cst_3 = arith.constant dense<0.000000e+00> : vector<8xf32>
    %9 = vector.multi_reduction <add>, %8, %cst_3 [1] : vector<8x32xf32> to vector<8xf32>
    %10 = vector.shape_cast %9 : vector<8xf32> to vector<8x1xf32>
    %cst_4 = arith.constant 3.200000e+01 : f32
    %11 = vector.broadcast %cst_4 : f32 to vector<8x1xf32>
    %12 = arith.divf %10, %11 : vector<8x1xf32>
    %13 = vector.broadcast %5 : vector<8x1xf32> to vector<8x32xf32>
    %14 = arith.subf %1, %13 : vector<8x32xf32>
    %cst_5 = arith.constant 9.99999974E-6 : f32
    %15 = vector.broadcast %cst_5 : f32 to vector<8x1xf32>
    %16 = arith.addf %12, %15 : vector<8x1xf32>
    %17 = math.rsqrt %16 : vector<8x1xf32>
    %18 = vector.broadcast %17 : vector<8x1xf32> to vector<8x32xf32>
    %19 = arith.mulf %14, %18 : vector<8x32xf32>
    %c0_6 = arith.constant 0 : index
    %c0_7 = arith.constant 0 : index
    %20 = vector.load %arg2[%c0_6, %c0_7] : memref<1x32xf32, #tpu.memory_space<vmem>>, vector<1x32xf32>
    %21 = vector.shape_cast %20 : vector<1x32xf32> to vector<32xf32>
    %22 = vector.shape_cast %21 : vector<32xf32> to vector<1x32xf32>
    %23 = vector.broadcast %22 : vector<1x32xf32> to vector<8x32xf32>
    %24 = arith.mulf %19, %23 : vector<8x32xf32>
    %c0_8 = arith.constant 0 : index
    %c0_9 = arith.constant 0 : index
    %25 = vector.load %arg3[%c0_8, %c0_9] : memref<1x32xf32, #tpu.memory_space<vmem>>, vector<1x32xf32>
    %26 = vector.shape_cast %25 : vector<1x32xf32> to vector<32xf32>
    %27 = vector.shape_cast %26 : vector<32xf32> to vector<1x32xf32>
    %28 = vector.broadcast %27 : vector<1x32xf32> to vector<8x32xf32>
    %29 = arith.addf %24, %28 : vector<8x32xf32>
    %30 = arith.truncf %29 : vector<8x32xf32> to vector<8x32xbf16>
    %c0_10 = arith.constant 0 : index
    %c0_11 = arith.constant 0 : index
    %31 = vector.load %arg4[%c0_10, %c0_11] : memref<32x96xbf16, #tpu.memory_space<vmem>>, vector<32x96xbf16>
    %cst_12 = arith.constant dense<0.000000e+00> : vector<8x96xf32>
    %32 = tpu.matmul %30, %31, %cst_12 {dimension_numbers = #tpu.dot_dimension_numbers<[1], [0], [0], [1], [0, 0, 1, 1], [], []>} : vector<8x32xbf16>, vector<32x96xbf16>, vector<8x96xf32> -> vector<8x96xf32>
    %c0_13 = arith.constant 0 : index
    %c0_14 = arith.constant 0 : index
    %33 = vector.load %arg5[%c0_13, %c0_14] : memref<1x96xf32, #tpu.memory_space<vmem>>, vector<1x96xf32>
    %34 = vector.shape_cast %33 : vector<1x96xf32> to vector<96xf32>
    %35 = vector.shape_cast %34 : vector<96xf32> to vector<1x96xf32>
    %36 = vector.broadcast %35 : vector<1x96xf32> to vector<8x96xf32>
    %37 = arith.addf %32, %36 : vector<8x96xf32>
    %c0_15 = arith.constant 0 : index
    %c0_16 = arith.constant 0 : index
    %c0_17 = arith.constant 0 : index
    %38 = vector.load %arg9[%c0_15, %c0_16, %c0_17] : memref<1x8x96xf32, #tpu.memory_space<vmem>>, vector<1x8x96xf32>
    %39 = vector.shape_cast %38 : vector<1x8x96xf32> to vector<8x96xf32>
    %40 = vector.shape_cast %37 : vector<8x96xf32> to vector<1x8x96xf32>
    tpu.vector_store %arg9[%c0_15, %c0_16, %c0_17], %40 {strides = array<i32>} : memref<1x8x96xf32, #tpu.memory_space<vmem>>, vector<1x8x96xf32>,
    %41 = vector.extract_strided_slice %37 {offsets = [0, 0], sizes = [8, 8], strides = [1, 1]} : vector<8x96xf32> to vector<8x8xf32>
    %cst_18 = arith.constant 0.353553385 : f32
    %42 = vector.broadcast %cst_18 : f32 to vector<8x8xf32>
    %43 = arith.mulf %41, %42 : vector<8x8xf32>
    %44 = arith.truncf %43 : vector<8x8xf32> to vector<8x8xbf16>
    %45 = vector.extract_strided_slice %37 {offsets = [0, 32], sizes = [8, 8], strides = [1, 1]} : vector<8x96xf32> to vector<8x8xf32>
    %46 = arith.truncf %45 : vector<8x8xf32> to vector<8x8xbf16>
    %47 = vector.extract_strided_slice %37 {offsets = [0, 64], sizes = [8, 8], strides = [1, 1]} : vector<8x96xf32> to vector<8x8xf32>
    %48 = arith.truncf %47 : vector<8x8xf32> to vector<8x8xbf16>
    %49 = tpu.transpose %46, [1, 0] : vector<8x8xbf16> -> vector<8x8xbf16>
    %cst_19 = arith.constant dense<0.000000e+00> : vector<8x8xf32>
    %50 = tpu.matmul %44, %49, %cst_19 {dimension_numbers = #tpu.dot_dimension_numbers<[1], [0], [0], [1], [0, 0, 1, 1], [], []>} : vector<8x8xbf16>, vector<8x8xbf16>, vector<8x8xf32> -> vector<8x8xf32>
    %cst_20 = arith.constant dense<0xFF800000> : vector<8xf32>
    %51 = vector.multi_reduction <maximumf>, %50, %cst_20 [1] : vector<8x8xf32> to vector<8xf32>
    %52 = vector.shape_cast %51 : vector<8xf32> to vector<8x1xf32>
    %53 = vector.broadcast %52 : vector<8x1xf32> to vector<8x8xf32>
    %54 = arith.subf %50, %53 : vector<8x8xf32>
    %55 = math.exp %54 : vector<8x8xf32>
    %cst_21 = arith.constant dense<0.000000e+00> : vector<8xf32>
    %56 = vector.multi_reduction <add>, %55, %cst_21 [1] : vector<8x8xf32> to vector<8xf32>
    %57 = vector.shape_cast %56 : vector<8xf32> to vector<8x1xf32>
    %58 = tpu.reciprocal %57 {approx = true} : vector<8x1xf32> -> vector<8x1xf32>
    %59 = arith.truncf %55 : vector<8x8xf32> to vector<8x8xbf16>
    %cst_22 = arith.constant dense<0.000000e+00> : vector<8x8xf32>
    %60 = tpu.matmul %59, %48, %cst_22 {dimension_numbers = #tpu.dot_dimension_numbers<[1], [0], [0], [1], [0, 0, 1, 1], [], []>} : vector<8x8xbf16>, vector<8x8xbf16>, vector<8x8xf32> -> vector<8x8xf32>
    %61 = vector.broadcast %58 : vector<8x1xf32> to vector<8x8xf32>
    %62 = arith.mulf %60, %61 : vector<8x8xf32>
    %63 = arith.truncf %62 : vector<8x8xf32> to vector<8x8xbf16>
    %c0_23 = arith.constant 0 : index
    %c0_24 = arith.constant 0 : index
    %64 = vector.load %arg6[%c0_23, %c0_24] : memref<32x32xbf16, #tpu.memory_space<vmem>>, vector<8x32xbf16>
    %cst_25 = arith.constant dense<0.000000e+00> : vector<8x32xf32>
    %65 = tpu.matmul %63, %64, %cst_25 {dimension_numbers = #tpu.dot_dimension_numbers<[1], [0], [0], [1], [0, 0, 1, 1], [], []>} : vector<8x8xbf16>, vector<8x32xbf16>, vector<8x32xf32> -> vector<8x32xf32>
    %c0_26 = arith.constant 0 : index
    %c0_27 = arith.constant 0 : index
    %66 = vector.load %arg10[%c0_26, %c0_27] : memref<8x32xf32, #tpu.memory_space<vmem>>, vector<8x32xf32>
    tpu.vector_store %arg10[%c0_26, %c0_27], %65 {strides = array<i32>} : memref<8x32xf32, #tpu.memory_space<vmem>>, vector<8x32xf32>,
    %67 = vector.extract_strided_slice %37 {offsets = [0, 8], sizes = [8, 8], strides = [1, 1]} : vector<8x96xf32> to vector<8x8xf32>
    %cst_28 = arith.constant 0.353553385 : f32
    %68 = vector.broadcast %cst_28 : f32 to vector<8x8xf32>
    %69 = arith.mulf %67, %68 : vector<8x8xf32>
    %70 = arith.truncf %69 : vector<8x8xf32> to vector<8x8xbf16>
    %71 = vector.extract_strided_slice %37 {offsets = [0, 40], sizes = [8, 8], strides = [1, 1]} : vector<8x96xf32> to vector<8x8xf32>
    %72 = arith.truncf %71 : vector<8x8xf32> to vector<8x8xbf16>
    %73 = vector.extract_strided_slice %37 {offsets = [0, 72], sizes = [8, 8], strides = [1, 1]} : vector<8x96xf32> to vector<8x8xf32>
    %74 = arith.truncf %73 : vector<8x8xf32> to vector<8x8xbf16>
    %75 = tpu.transpose %72, [1, 0] : vector<8x8xbf16> -> vector<8x8xbf16>
    %cst_29 = arith.constant dense<0.000000e+00> : vector<8x8xf32>
    %76 = tpu.matmul %70, %75, %cst_29 {dimension_numbers = #tpu.dot_dimension_numbers<[1], [0], [0], [1], [0, 0, 1, 1], [], []>} : vector<8x8xbf16>, vector<8x8xbf16>, vector<8x8xf32> -> vector<8x8xf32>
    %cst_30 = arith.constant dense<0xFF800000> : vector<8xf32>
    %77 = vector.multi_reduction <maximumf>, %76, %cst_30 [1] : vector<8x8xf32> to vector<8xf32>
    %78 = vector.shape_cast %77 : vector<8xf32> to vector<8x1xf32>
    %79 = vector.broadcast %78 : vector<8x1xf32> to vector<8x8xf32>
    %80 = arith.subf %76, %79 : vector<8x8xf32>
    %81 = math.exp %80 : vector<8x8xf32>
    %cst_31 = arith.constant dense<0.000000e+00> : vector<8xf32>
    %82 = vector.multi_reduction <add>, %81, %cst_31 [1] : vector<8x8xf32> to vector<8xf32>
    %83 = vector.shape_cast %82 : vector<8xf32> to vector<8x1xf32>
    %84 = tpu.reciprocal %83 {approx = true} : vector<8x1xf32> -> vector<8x1xf32>
    %85 = arith.truncf %81 : vector<8x8xf32> to vector<8x8xbf16>
    %cst_32 = arith.constant dense<0.000000e+00> : vector<8x8xf32>
    %86 = tpu.matmul %85, %74, %cst_32 {dimension_numbers = #tpu.dot_dimension_numbers<[1], [0], [0], [1], [0, 0, 1, 1], [], []>} : vector<8x8xbf16>, vector<8x8xbf16>, vector<8x8xf32> -> vector<8x8xf32>
    %87 = vector.broadcast %84 : vector<8x1xf32> to vector<8x8xf32>
    %88 = arith.mulf %86, %87 : vector<8x8xf32>
    %89 = arith.truncf %88 : vector<8x8xf32> to vector<8x8xbf16>
    %c8 = arith.constant 8 : index
    %c0_33 = arith.constant 0 : index
    %90 = vector.load %arg6[%c8, %c0_33] : memref<32x32xbf16, #tpu.memory_space<vmem>>, vector<8x32xbf16>
    %cst_34 = arith.constant dense<0.000000e+00> : vector<8x32xf32>
    %91 = tpu.matmul %89, %90, %cst_34 {dimension_numbers = #tpu.dot_dimension_numbers<[1], [0], [0], [1], [0, 0, 1, 1], [], []>} : vector<8x8xbf16>, vector<8x32xbf16>, vector<8x32xf32> -> vector<8x32xf32>
    %c0_35 = arith.constant 0 : index
    %c0_36 = arith.constant 0 : index
    %92 = vector.load %arg10[%c0_35, %c0_36] : memref<8x32xf32, #tpu.memory_space<vmem>>, vector<8x32xf32>
    %93 = arith.addf %92, %91 : vector<8x32xf32>
    %c0_37 = arith.constant 0 : index
    %c0_38 = arith.constant 0 : index
    %94 = vector.load %arg10[%c0_37, %c0_38] : memref<8x32xf32, #tpu.memory_space<vmem>>, vector<8x32xf32>
    tpu.vector_store %arg10[%c0_37, %c0_38], %93 {strides = array<i32>} : memref<8x32xf32, #tpu.memory_space<vmem>>, vector<8x32xf32>,
    %95 = vector.extract_strided_slice %37 {offsets = [0, 16], sizes = [8, 8], strides = [1, 1]} : vector<8x96xf32> to vector<8x8xf32>
    %cst_39 = arith.constant 0.353553385 : f32
    %96 = vector.broadcast %cst_39 : f32 to vector<8x8xf32>
    %97 = arith.mulf %95, %96 : vector<8x8xf32>
    %98 = arith.truncf %97 : vector<8x8xf32> to vector<8x8xbf16>
    %99 = vector.extract_strided_slice %37 {offsets = [0, 48], sizes = [8, 8], strides = [1, 1]} : vector<8x96xf32> to vector<8x8xf32>
    %100 = arith.truncf %99 : vector<8x8xf32> to vector<8x8xbf16>
    %101 = vector.extract_strided_slice %37 {offsets = [0, 80], sizes = [8, 8], strides = [1, 1]} : vector<8x96xf32> to vector<8x8xf32>
    %102 = arith.truncf %101 : vector<8x8xf32> to vector<8x8xbf16>
    %103 = tpu.transpose %100, [1, 0] : vector<8x8xbf16> -> vector<8x8xbf16>
    %cst_40 = arith.constant dense<0.000000e+00> : vector<8x8xf32>
    %104 = tpu.matmul %98, %103, %cst_40 {dimension_numbers = #tpu.dot_dimension_numbers<[1], [0], [0], [1], [0, 0, 1, 1], [], []>} : vector<8x8xbf16>, vector<8x8xbf16>, vector<8x8xf32> -> vector<8x8xf32>
    %cst_41 = arith.constant dense<0xFF800000> : vector<8xf32>
    %105 = vector.multi_reduction <maximumf>, %104, %cst_41 [1] : vector<8x8xf32> to vector<8xf32>
    %106 = vector.shape_cast %105 : vector<8xf32> to vector<8x1xf32>
    %107 = vector.broadcast %106 : vector<8x1xf32> to vector<8x8xf32>
    %108 = arith.subf %104, %107 : vector<8x8xf32>
    %109 = math.exp %108 : vector<8x8xf32>
    %cst_42 = arith.constant dense<0.000000e+00> : vector<8xf32>
    %110 = vector.multi_reduction <add>, %109, %cst_42 [1] : vector<8x8xf32> to vector<8xf32>
    %111 = vector.shape_cast %110 : vector<8xf32> to vector<8x1xf32>
    %112 = tpu.reciprocal %111 {approx = true} : vector<8x1xf32> -> vector<8x1xf32>
    %113 = arith.truncf %109 : vector<8x8xf32> to vector<8x8xbf16>
    %cst_43 = arith.constant dense<0.000000e+00> : vector<8x8xf32>
    %114 = tpu.matmul %113, %102, %cst_43 {dimension_numbers = #tpu.dot_dimension_numbers<[1], [0], [0], [1], [0, 0, 1, 1], [], []>} : vector<8x8xbf16>, vector<8x8xbf16>, vector<8x8xf32> -> vector<8x8xf32>
    %115 = vector.broadcast %112 : vector<8x1xf32> to vector<8x8xf32>
    %116 = arith.mulf %114, %115 : vector<8x8xf32>
    %117 = arith.truncf %116 : vector<8x8xf32> to vector<8x8xbf16>
    %c16 = arith.constant 16 : index
    %c0_44 = arith.constant 0 : index
    %118 = vector.load %arg6[%c16, %c0_44] : memref<32x32xbf16, #tpu.memory_space<vmem>>, vector<8x32xbf16>
    %cst_45 = arith.constant dense<0.000000e+00> : vector<8x32xf32>
    %119 = tpu.matmul %117, %118, %cst_45 {dimension_numbers = #tpu.dot_dimension_numbers<[1], [0], [0], [1], [0, 0, 1, 1], [], []>} : vector<8x8xbf16>, vector<8x32xbf16>, vector<8x32xf32> -> vector<8x32xf32>
    %c0_46 = arith.constant 0 : index
    %c0_47 = arith.constant 0 : index
    %120 = vector.load %arg10[%c0_46, %c0_47] : memref<8x32xf32, #tpu.memory_space<vmem>>, vector<8x32xf32>
    %121 = arith.addf %120, %119 : vector<8x32xf32>
    %c0_48 = arith.constant 0 : index
    %c0_49 = arith.constant 0 : index
    %122 = vector.load %arg10[%c0_48, %c0_49] : memref<8x32xf32, #tpu.memory_space<vmem>>, vector<8x32xf32>
    tpu.vector_store %arg10[%c0_48, %c0_49], %121 {strides = array<i32>} : memref<8x32xf32, #tpu.memory_space<vmem>>, vector<8x32xf32>,
    %123 = vector.extract_strided_slice %37 {offsets = [0, 24], sizes = [8, 8], strides = [1, 1]} : vector<8x96xf32> to vector<8x8xf32>
    %cst_50 = arith.constant 0.353553385 : f32
    %124 = vector.broadcast %cst_50 : f32 to vector<8x8xf32>
    %125 = arith.mulf %123, %124 : vector<8x8xf32>
    %126 = arith.truncf %125 : vector<8x8xf32> to vector<8x8xbf16>
    %127 = vector.extract_strided_slice %37 {offsets = [0, 56], sizes = [8, 8], strides = [1, 1]} : vector<8x96xf32> to vector<8x8xf32>
    %128 = arith.truncf %127 : vector<8x8xf32> to vector<8x8xbf16>
    %129 = vector.extract_strided_slice %37 {offsets = [0, 88], sizes = [8, 8], strides = [1, 1]} : vector<8x96xf32> to vector<8x8xf32>
    %130 = arith.truncf %129 : vector<8x8xf32> to vector<8x8xbf16>
    %131 = tpu.transpose %128, [1, 0] : vector<8x8xbf16> -> vector<8x8xbf16>
    %cst_51 = arith.constant dense<0.000000e+00> : vector<8x8xf32>
    %132 = tpu.matmul %126, %131, %cst_51 {dimension_numbers = #tpu.dot_dimension_numbers<[1], [0], [0], [1], [0, 0, 1, 1], [], []>} : vector<8x8xbf16>, vector<8x8xbf16>, vector<8x8xf32> -> vector<8x8xf32>
    %cst_52 = arith.constant dense<0xFF800000> : vector<8xf32>
    %133 = vector.multi_reduction <maximumf>, %132, %cst_52 [1] : vector<8x8xf32> to vector<8xf32>
    %134 = vector.shape_cast %133 : vector<8xf32> to vector<8x1xf32>
    %135 = vector.broadcast %134 : vector<8x1xf32> to vector<8x8xf32>
    %136 = arith.subf %132, %135 : vector<8x8xf32>
    %137 = math.exp %136 : vector<8x8xf32>
    %cst_53 = arith.constant dense<0.000000e+00> : vector<8xf32>
    %138 = vector.multi_reduction <add>, %137, %cst_53 [1] : vector<8x8xf32> to vector<8xf32>
    %139 = vector.shape_cast %138 : vector<8xf32> to vector<8x1xf32>
    %140 = tpu.reciprocal %139 {approx = true} : vector<8x1xf32> -> vector<8x1xf32>
    %141 = arith.truncf %137 : vector<8x8xf32> to vector<8x8xbf16>
    %cst_54 = arith.constant dense<0.000000e+00> : vector<8x8xf32>
    %142 = tpu.matmul %141, %130, %cst_54 {dimension_numbers = #tpu.dot_dimension_numbers<[1], [0], [0], [1], [0, 0, 1, 1], [], []>} : vector<8x8xbf16>, vector<8x8xbf16>, vector<8x8xf32> -> vector<8x8xf32>
    %143 = vector.broadcast %140 : vector<8x1xf32> to vector<8x8xf32>
    %144 = arith.mulf %142, %143 : vector<8x8xf32>
    %145 = arith.truncf %144 : vector<8x8xf32> to vector<8x8xbf16>
    %c24 = arith.constant 24 : index
    %c0_55 = arith.constant 0 : index
    %146 = vector.load %arg6[%c24, %c0_55] : memref<32x32xbf16, #tpu.memory_space<vmem>>, vector<8x32xbf16>
    %cst_56 = arith.constant dense<0.000000e+00> : vector<8x32xf32>
    %147 = tpu.matmul %145, %146, %cst_56 {dimension_numbers = #tpu.dot_dimension_numbers<[1], [0], [0], [1], [0, 0, 1, 1], [], []>} : vector<8x8xbf16>, vector<8x32xbf16>, vector<8x32xf32> -> vector<8x32xf32>
    %c0_57 = arith.constant 0 : index
    %c0_58 = arith.constant 0 : index
    %148 = vector.load %arg10[%c0_57, %c0_58] : memref<8x32xf32, #tpu.memory_space<vmem>>, vector<8x32xf32>
    %149 = arith.addf %148, %147 : vector<8x32xf32>
    %c0_59 = arith.constant 0 : index
    %c0_60 = arith.constant 0 : index
    %150 = vector.load %arg10[%c0_59, %c0_60] : memref<8x32xf32, #tpu.memory_space<vmem>>, vector<8x32xf32>
    tpu.vector_store %arg10[%c0_59, %c0_60], %149 {strides = array<i32>} : memref<8x32xf32, #tpu.memory_space<vmem>>, vector<8x32xf32>,
    %c0_61 = arith.constant 0 : index
    %c0_62 = arith.constant 0 : index
    %151 = vector.load %arg10[%c0_61, %c0_62] : memref<8x32xf32, #tpu.memory_space<vmem>>, vector<8x32xf32>
    %c0_63 = arith.constant 0 : index
    %c0_64 = arith.constant 0 : index
    %152 = vector.load %arg7[%c0_63, %c0_64] : memref<1x32xf32, #tpu.memory_space<vmem>>, vector<1x32xf32>
    %153 = vector.shape_cast %152 : vector<1x32xf32> to vector<32xf32>
    %154 = vector.shape_cast %153 : vector<32xf32> to vector<1x32xf32>
    %155 = vector.broadcast %154 : vector<1x32xf32> to vector<8x32xf32>
    %156 = arith.addf %151, %155 : vector<8x32xf32>
    %157 = arith.addf %156, %1 : vector<8x32xf32>
    %c0_65 = arith.constant 0 : index
    %c0_66 = arith.constant 0 : index
    %c0_67 = arith.constant 0 : index
    %158 = vector.load %arg8[%c0_65, %c0_66, %c0_67] : memref<1x8x32xf32, #tpu.memory_space<vmem>>, vector<1x8x32xf32>
    %159 = vector.shape_cast %158 : vector<1x8x32xf32> to vector<8x32xf32>
    %160 = vector.shape_cast %157 : vector<8x32xf32> to vector<1x8x32xf32>
    tpu.vector_store %arg8[%c0_65, %c0_66, %c0_67], %160 {strides = array<i32>} : memref<1x8x32xf32, #tpu.memory_space<vmem>>, vector<1x8x32xf32>,
    return
  }
  func.func @transform_0(%arg0: i32) -> (i32, i32, i32) {
    %c0_i32 = arith.constant 0 : i32
    %c0_i32_0 = arith.constant 0 : i32
    %c0_i32_1 = arith.constant 0 : i32
    return %arg0, %c0_i32, %c0_i32_0 : i32, i32, i32
  }
  func.func @transform_1(%arg0: i32) -> (i32, i32) {
    %c0_i32 = arith.constant 0 : i32
    %c0_i32_0 = arith.constant 0 : i32
    %c0_i32_1 = arith.constant 0 : i32
    return %c0_i32, %c0_i32_0 : i32, i32
  }
  func.func @transform_2(%arg0: i32) -> (i32, i32) {
    %c0_i32 = arith.constant 0 : i32
    %c0_i32_0 = arith.constant 0 : i32
    %c0_i32_1 = arith.constant 0 : i32
    return %c0_i32, %c0_i32_0 : i32, i32
  }
  func.func @transform_3(%arg0: i32) -> (i32, i32) {
    %c0_i32 = arith.constant 0 : i32
    %c0_i32_0 = arith.constant 0 : i32
    %c0_i32_1 = arith.constant 0 : i32
    return %c0_i32, %c0_i32_0 : i32, i32
  }
  func.func @transform_4(%arg0: i32) -> (i32, i32) {
    %c0_i32 = arith.constant 0 : i32
    %c0_i32_0 = arith.constant 0 : i32
    %c0_i32_1 = arith.constant 0 : i32
    return %c0_i32, %c0_i32_0 : i32, i32
  }
  func.func @transform_5(%arg0: i32) -> (i32, i32) {
    %c0_i32 = arith.constant 0 : i32
    %c0_i32_0 = arith.constant 0 : i32
    %c0_i32_1 = arith.constant 0 : i32
    return %c0_i32, %c0_i32_0 : i32, i32
  }
  func.func @transform_6(%arg0: i32) -> (i32, i32) {
    %c0_i32 = arith.constant 0 : i32
    %c0_i32_0 = arith.constant 0 : i32
    %c0_i32_1 = arith.constant 0 : i32
    return %c0_i32, %c0_i32_0 : i32, i32
  }
  func.func @transform_7(%arg0: i32) -> (i32, i32, i32) {
    %c0_i32 = arith.constant 0 : i32
    %c0_i32_0 = arith.constant 0 : i32
    %c0_i32_1 = arith.constant 0 : i32
    return %arg0, %c0_i32, %c0_i32_0 : i32, i32, i32
  }
  func.func @transform_8(%arg0: i32) -> (i32, i32, i32) {
    %c0_i32 = arith.constant 0 : i32
    %c0_i32_0 = arith.constant 0 : i32
    %c0_i32_1 = arith.constant 0 : i32
    return %arg0, %c0_i32, %c0_i32_0 : i32, i32, i32
  }
}

</mosaic_0001>

<llo_original>
// kernel: tpu_custom_call.1
$region0: #{tpu_custom_call.1}
  #allocation0 [shape = 'u32[]', space=smem, size = 0x4, offset = 0x4, fixed_abs, tag = 'smem constant byte address 0x4 - core index']
  #allocation1 [shape = 'u32[144,128]{1,0:T(1,128)}', space=vmem, size = 0x12000, scoped, tag = 'internal scratch']
  #allocation2 [shape = 'f32[8,32]{1,0:T(8,128)}', space=vmem, size = 0x1000, scoped, tag = 'scratch operand']
  %s0 = inlined_call_operand.hbm [shape: f32[2,8,32], index: 0, kind: input, shape index: {}]
  %s1 = inlined_call_operand.vmem [shape: f32[1,32], index: 1, kind: input, shape index: {}]
  %s2 = inlined_call_operand.vmem [shape: f32[1,32], index: 2, kind: input, shape index: {}]
  %s3 = inlined_call_operand.hbm [shape: bf16[32,96], index: 3, kind: input, shape index: {}]
  %s4 = inlined_call_operand.vmem [shape: f32[1,96], index: 4, kind: input, shape index: {}]
  %s5 = inlined_call_operand.hbm [shape: bf16[32,32], index: 5, kind: input, shape index: {}]
  %s6 = inlined_call_operand.vmem [shape: f32[1,32], index: 6, kind: input, shape index: {}]
  %s7 = inlined_call_operand.hbm [shape: f32[2,8,32], index: 7, kind: output, shape index: {0}]
  %s8 = inlined_call_operand.hbm [shape: f32[2,8,96], index: 8, kind: output, shape index: {1}]
  %9 = xla_tuple %s7, %s8
  %s10 = sld [smem:[#allocation0]]
  $region81: #{tpu_custom_call.1} parent=0
    _
  %s12 = ssub.s32 1, %s10
  %s13 = scalar_select 0, %s12, %s10
  $region1: #{tpu_custom_call.1} parent=0
    #allocation3 [shape = 'u8[8192]{0}', space=vmem, size = 0x2000, scoped, tag = 'input window, operand 0']
    #allocation4 [shape = 's32[2]{0}', space=sflag, size = 0x8, scoped, tag = 'scoped memory for tpu_custom_call.1']
    #allocation5 [shape = 's32[2]{0}', space=sflag, size = 0x8, scoped, tag = 'scoped memory for tpu_custom_call.1']
    #allocation6 [shape = 'u8[8192]{0}', space=vmem, size = 0x2000, scoped, tag = 'input window, operand 3, single buffered']
    #allocation7 [shape = 's32[1]{0}', space=sflag, size = 0x4, scoped, tag = 'scoped memory for tpu_custom_call.1']
    #allocation8 [shape = 'u8[8192]{0}', space=vmem, size = 0x2000, scoped, tag = 'input window, operand 5, single buffered']
    #allocation9 [shape = 'u8[8192]{0}', space=vmem, size = 0x2000, scoped, tag = 'output window, operand 0']
    #allocation10 [shape = 'u8[8192]{0}', space=vmem, size = 0x2000, scoped, tag = 'output window, operand 1']
    #allocation11 [shape = 's32[2]{0}', space=sflag, size = 0x8, scoped, tag = 'scoped memory for tpu_custom_call.1']
    %14 = vsyncpa [#allocation4], 0
    %s15 = scalar_lea.sflag [#allocation4], 1
    %16 = vsyncpa %s15, 0
    %17 = vsyncpa [#allocation7], 0
    %18 = vsyncpa [#allocation5], 0
    %s19 = scalar_lea.sflag [#allocation5], 1
    %20 = vsyncpa %s19, 0
    %21 = vsyncpa [#allocation11], 0
    %s22 = scalar_lea.sflag [#allocation11], 1
    %23 = vsyncpa %s22, 0
    loop: start=0, step=1, limit=4
    $region2: #{tpu_custom_call.1} parent=1 // loop_pre_header
      _
    $region3: #{tpu_custom_call.1} parent=1 // loop_header
      %s25 = sphi 0, %s29
      %p26 = scmp.ge.s32.totalorder %s25, 4
      %s35 = sphi 0, %s37
      %s38 = sphi 0, %s35
      %s39 = sphi 0, %s38
      %s55 = sphi 0, %s39
      %s59 = sphi 0, %s59
      %s61 = sphi 0, %s59
      %s62 = sphi 0, %s61
      %s76 = sphi 0, %s62
      %s80 = sphi 0, %s80
      %s82 = sphi 0, %s80
      %s83 = sphi 0, %s82
      %s97 = sphi 0, %s83
      %s101 = sphi 0, %s101
      %s103 = sphi 0, %s101
      %s104 = sphi 0, %s103
      %s118 = sphi 0, %s104
      %s122 = sphi 0, %s122
      %s124 = sphi 0, %s122
      %s125 = sphi 0, %s124
      %s139 = sphi 0, %s125
      %s143 = sphi 0, %s143
      %s145 = sphi 0, %s143
      %s146 = sphi 0, %s145
      %s160 = sphi 0, %s146
      %s164 = sphi 0, %s164
      %s166 = sphi 0, %s164
      %s167 = sphi 0, %s166
      %s181 = sphi 0, %s167
      %s187 = sphi 0, %s189
      %s190 = sphi 0, %s187
      %s191 = sphi 0, %s190
      %s207 = sphi 0, %s191
      %s213 = sphi 0, %s215
      %s216 = sphi 0, %s213
      %s217 = sphi 0, %s216
      %s233 = sphi 0, %s217
    $region4: #{tpu_custom_call.1} parent=1 // loop_header_branch
      %28 = sbr.rel (%p26) target = $region8
    $region5: #{tpu_custom_call.1} parent=1 // loop_body
      %s30 = ssub.s32 %s25, 1
      %s31 = ssub.s32 %s25, 2
      %s32 = sadd.s32 %s25, 1
      %s33 = ssub.s32 %s25, %s32
      %p34 = scmp.eq.s32.totalorder %s33, 0
      %s36 = sadd.s32 %s35, 1
      %s37 = scalar_select %p34, %s35, %s36
      %p40 = pneg %p34
      %p41 = scmp.eq.s32.totalorder %s25, 1
      %p42 = por %p40, %p41
      %p43 = scmp.ne.s32.totalorder %s35, %s38
      %p44 = scmp.eq.s32.totalorder %s25, 0
      %p45 = por %p43, %p44
      %p46 = scmp.ne.s32.totalorder %s35, %s38
      %p47 = scmp.eq.s32.totalorder %s30, 1
      %p48 = por %p46, %p47
      %p49 = scmp.ne.s32.totalorder %s38, %s39
      %p50 = scmp.eq.s32.totalorder %s30, 0
      %p51 = por %p49, %p50
      %p52 = scmp.ne.s32.totalorder %s38, %s39
      %p53 = scmp.eq.s32.totalorder %s31, 1
      %p54 = por %p52, %p53
      %p56 = scmp.ne.s32.totalorder %s39, %s55
      %p57 = scmp.eq.s32.totalorder %s31, 0
      %p58 = por %p56, %p57
      %s60 = sadd.s32 %s59, 1
      %p63 = scmp.eq.s32.totalorder %s25, 1
      %p64 = scmp.ne.s32.totalorder %s59, %s61
      %p65 = scmp.eq.s32.totalorder %s25, 0
      %p66 = por %p64, %p65
      %p67 = scmp.ne.s32.totalorder %s59, %s61
      %p68 = scmp.eq.s32.totalorder %s30, 1
      %p69 = por %p67, %p68
      %p70 = scmp.ne.s32.totalorder %s61, %s62
      %p71 = scmp.eq.s32.totalorder %s30, 0
      %p72 = por %p70, %p71
      %p73 = scmp.ne.s32.totalorder %s61, %s62
      %p74 = scmp.eq.s32.totalorder %s31, 1
      %p75 = por %p73, %p74
      %p77 = scmp.ne.s32.totalorder %s62, %s76
      %p78 = scmp.eq.s32.totalorder %s31, 0
      %p79 = por %p77, %p78
      %s81 = sadd.s32 %s80, 1
      %p84 = scmp.eq.s32.totalorder %s25, 1
      %p85 = scmp.ne.s32.totalorder %s80, %s82
      %p86 = scmp.eq.s32.totalorder %s25, 0
      %p87 = por %p85, %p86
      %p88 = scmp.ne.s32.totalorder %s80, %s82
      %p89 = scmp.eq.s32.totalorder %s30, 1
      %p90 = por %p88, %p89
      %p91 = scmp.ne.s32.totalorder %s82, %s83
      %p92 = scmp.eq.s32.totalorder %s30, 0
      %p93 = por %p91, %p92
      %p94 = scmp.ne.s32.totalorder %s82, %s83
      %p95 = scmp.eq.s32.totalorder %s31, 1
      %p96 = por %p94, %p95
      %p98 = scmp.ne.s32.totalorder %s83, %s97
      %p99 = scmp.eq.s32.totalorder %s31, 0
      %p100 = por %p98, %p99
      %s102 = sadd.s32 %s101, 1
      %p105 = scmp.eq.s32.totalorder %s25, 1
      %p106 = scmp.ne.s32.totalorder %s101, %s103
      %p107 = scmp.eq.s32.totalorder %s25, 0
      %p108 = por %p106, %p107
      %p109 = scmp.ne.s32.totalorder %s101, %s103
      %p110 = scmp.eq.s32.totalorder %s30, 1
      %p111 = por %p109, %p110
      %p112 = scmp.ne.s32.totalorder %s103, %s104
      %p113 = scmp.eq.s32.totalorder %s30, 0
      %p114 = por %p112, %p113
      %p115 = scmp.ne.s32.totalorder %s103, %s104
      %p116 = scmp.eq.s32.totalorder %s31, 1
      %p117 = por %p115, %p116
      %p119 = scmp.ne.s32.totalorder %s104, %s118
      %p120 = scmp.eq.s32.totalorder %s31, 0
      %p121 = por %p119, %p120
      %s123 = sadd.s32 %s122, 1
      %p126 = scmp.eq.s32.totalorder %s25, 1
      %p127 = scmp.ne.s32.totalorder %s122, %s124
      %p128 = scmp.eq.s32.totalorder %s25, 0
      %p129 = por %p127, %p128
      %p130 = scmp.ne.s32.totalorder %s122, %s124
      %p131 = scmp.eq.s32.totalorder %s30, 1
      %p132 = por %p130, %p131
      %p133 = scmp.ne.s32.totalorder %s124, %s125
      %p134 = scmp.eq.s32.totalorder %s30, 0
      %p135 = por %p133, %p134
      %p136 = scmp.ne.s32.totalorder %s124, %s125
      %p137 = scmp.eq.s32.totalorder %s31, 1
      %p138 = por %p136, %p137
      %p140 = scmp.ne.s32.totalorder %s125, %s139
      %p141 = scmp.eq.s32.totalorder %s31, 0
      %p142 = por %p140, %p141
      %s144 = sadd.s32 %s143, 1
      %p147 = scmp.eq.s32.totalorder %s25, 1
      %p148 = scmp.ne.s32.totalorder %s143, %s145
      %p149 = scmp.eq.s32.totalorder %s25, 0
      %p150 = por %p148, %p149
      %p151 = scmp.ne.s32.totalorder %s143, %s145
      %p152 = scmp.eq.s32.totalorder %s30, 1
      %p153 = por %p151, %p152
      %p154 = scmp.ne.s32.totalorder %s145, %s146
      %p155 = scmp.eq.s32.totalorder %s30, 0
      %p156 = por %p154, %p155
      %p157 = scmp.ne.s32.totalorder %s145, %s146
      %p158 = scmp.eq.s32.totalorder %s31, 1
      %p159 = por %p157, %p158
      %p161 = scmp.ne.s32.totalorder %s146, %s160
      %p162 = scmp.eq.s32.totalorder %s31, 0
      %p163 = por %p161, %p162
      %s165 = sadd.s32 %s164, 1
      %p168 = scmp.eq.s32.totalorder %s25, 1
      %p169 = scmp.ne.s32.totalorder %s164, %s166
      %p170 = scmp.eq.s32.totalorder %s25, 0
      %p171 = por %p169, %p170
      %p172 = scmp.ne.s32.totalorder %s164, %s166
      %p173 = scmp.eq.s32.totalorder %s30, 1
      %p174 = por %p172, %p173
      %p175 = scmp.ne.s32.totalorder %s166, %s167
      %p176 = scmp.eq.s32.totalorder %s30, 0
      %p177 = por %p175, %p176
      %p178 = scmp.ne.s32.totalorder %s166, %s167
      %p179 = scmp.eq.s32.totalorder %s31, 1
      %p180 = por %p178, %p179
      %p182 = scmp.ne.s32.totalorder %s167, %s181
      %p183 = scmp.eq.s32.totalorder %s31, 0
      %p184 = por %p182, %p183
      %s185 = ssub.s32 %s25, %s32
      %p186 = scmp.eq.s32.totalorder %s185, 0
      %s188 = sadd.s32 %s187, 1
      %s189 = scalar_select %p186, %s187, %s188
      %p192 = pneg %p186
      %p193 = scmp.eq.s32.totalorder %s25, 1
      %p194 = por %p192, %p193
      %p195 = scmp.ne.s32.totalorder %s187, %s190
      %p196 = scmp.eq.s32.totalorder %s25, 0
      %p197 = por %p195, %p196
      %p198 = scmp.ne.s32.totalorder %s187, %s190
      %p199 = scmp.eq.s32.totalorder %s30, 1
      %p200 = por %p198, %p199
      %p201 = scmp.ne.s32.totalorder %s190, %s191
      %p202 = scmp.eq.s32.totalorder %s30, 0
      %p203 = por %p201, %p202
      %p204 = scmp.ne.s32.totalorder %s190, %s191
      %p205 = scmp.eq.s32.totalorder %s31, 1
      %p206 = por %p204, %p205
      %p208 = scmp.ne.s32.totalorder %s191, %s207
      %p209 = scmp.eq.s32.totalorder %s31, 0
      %p210 = por %p208, %p209
      %s211 = ssub.s32 %s25, %s32
      %p212 = scmp.eq.s32.totalorder %s211, 0
      %s214 = sadd.s32 %s213, 1
      %s215 = scalar_select %p212, %s213, %s214
      %p218 = pneg %p212
      %p219 = scmp.eq.s32.totalorder %s25, 1
      %p220 = por %p218, %p219
      %p221 = scmp.ne.s32.totalorder %s213, %s216
      %p222 = scmp.eq.s32.totalorder %s25, 0
      %p223 = por %p221, %p222
      %p224 = scmp.ne.s32.totalorder %s213, %s216
      %p225 = scmp.eq.s32.totalorder %s30, 1
      %p226 = por %p224, %p225
      %p227 = scmp.ne.s32.totalorder %s216, %s217
      %p228 = scmp.eq.s32.totalorder %s30, 0
      %p229 = por %p227, %p228
      %p230 = scmp.ne.s32.totalorder %s216, %s217
      %p231 = scmp.eq.s32.totalorder %s31, 1
      %p232 = por %p230, %p231
      %p234 = scmp.ne.s32.totalorder %s217, %s233
      %p235 = scmp.eq.s32.totalorder %s31, 0
      %p236 = por %p234, %p235
      %p237 = scmp.le.s32.totalorder 1, %s25
      %p238 = scmp.lt.s32.totalorder %s25, 3
      %p239 = pnand %p237, %p238
      %p240 = pneg %p239
      // Predicated region
      $region9: #{tpu_custom_call.1} parent=5 // pred_check
        _
      $region10: #{tpu_custom_call.1} parent=5 // pred_check_branch
        %242 = sbr.rel (%p239) target = $region12
      $region11: #{tpu_custom_call.1} parent=5 // pred_region
        %s243 = ssub.s32 %s25, 1
        // Predicated region
        $region13: #{tpu_custom_call.1} parent=11 // pred_check
          %p244 = pneg %p72
        $region14: #{tpu_custom_call.1} parent=11 // pred_check_branch
          %246 = sbr.rel (%p244) target = $region16
        $region15: #{tpu_custom_call.1} parent=11 // pred_region
          _
        $region16: #{tpu_custom_call.1} parent=11 // pred_fallthru
          _
        // Predicated region
        $region17: #{tpu_custom_call.1} parent=11 // pred_check
          %p247 = pneg %p93
        $region18: #{tpu_custom_call.1} parent=11 // pred_check_branch
          %249 = sbr.rel (%p247) target = $region20
        $region19: #{tpu_custom_call.1} parent=11 // pred_region
          _
        $region20: #{tpu_custom_call.1} parent=11 // pred_fallthru
          _
        // Predicated region
        $region21: #{tpu_custom_call.1} parent=11 // pred_check
          %p250 = pneg %p114
        $region22: #{tpu_custom_call.1} parent=11 // pred_check_branch
          %252 = sbr.rel (%p250) target = $region24
        $region23: #{tpu_custom_call.1} parent=11 // pred_region
          %s254 = ssub.s32 256, 256
          %255 = vsyncadd [#allocation7], %s254
          %s256 = sshll.u32 [#allocation6], 4
          %s257 = int_to_ptr.vmem [resolvable:$true] %s256
          %262 = dma.hbm_to_vmem [thread:$0]  %s3, 256, %s257, [#allocation7], 64, 64, 4
        $region24: #{tpu_custom_call.1} parent=11 // pred_fallthru
          _
        // Predicated region
        $region25: #{tpu_custom_call.1} parent=11 // pred_check
          %p263 = pneg %p135
        $region26: #{tpu_custom_call.1} parent=11 // pred_check_branch
          %265 = sbr.rel (%p263) target = $region28
        $region27: #{tpu_custom_call.1} parent=11 // pred_region
          _
        $region28: #{tpu_custom_call.1} parent=11 // pred_fallthru
          _
        // Predicated region
        $region29: #{tpu_custom_call.1} parent=11 // pred_check
          %p266 = pneg %p156
        $region30: #{tpu_custom_call.1} parent=11 // pred_check_branch
          %268 = sbr.rel (%p266) target = $region32
        $region31: #{tpu_custom_call.1} parent=11 // pred_region
          %s270 = ssub.s32 256, 256
          %271 = vsyncadd [#allocation7], %s270
          %s272 = sshll.u32 [#allocation8], 4
          %s273 = int_to_ptr.vmem [resolvable:$true] %s272
          %278 = dma.hbm_to_vmem [thread:$0]  %s5, 256, %s273, [#allocation7], 64, 64, 4
        $region32: #{tpu_custom_call.1} parent=11 // pred_fallthru
          _
        // Predicated region
        $region33: #{tpu_custom_call.1} parent=11 // pred_check
          %p279 = pneg %p177
        $region34: #{tpu_custom_call.1} parent=11 // pred_check_branch
          %281 = sbr.rel (%p279) target = $region36
        $region35: #{tpu_custom_call.1} parent=11 // pred_region
          _
        $region36: #{tpu_custom_call.1} parent=11 // pred_fallthru
          _
      $region12: #{tpu_custom_call.1} parent=5 // pred_fallthru
        _
      %p282 = scmp.lt.s32.totalorder %s25, 2
      // Predicated region
      $region37: #{tpu_custom_call.1} parent=5 // pred_check
        %p283 = pneg %p282
      $region38: #{tpu_custom_call.1} parent=5 // pred_check_branch
        %285 = sbr.rel (%p283) target = $region40
      $region39: #{tpu_custom_call.1} parent=5 // pred_region
        // Predicated region
        $region41: #{tpu_custom_call.1} parent=39 // pred_check
          %p286 = pneg %p45
        $region42: #{tpu_custom_call.1} parent=39 // pred_check_branch
          %288 = sbr.rel (%p286) target = $region44
        $region43: #{tpu_custom_call.1} parent=39 // pred_region
          %s289 = sand.u32 %s35, 1
          %s290 = scalar_lea.sflag [#allocation4], %s289
          %s291 = sand.u32 %s35, 1
          %s292 = smul.addr %s291, 8
          %s293 = scalar_lea.vmem [#allocation3], %s292
          %s295 = ssub.s32 128, 128
          %296 = vsyncadd %s290, %s295
          %s297 = smul.addr %s25, 128
          %s298 = scalar_lea.hbm %s0, %s297
          %s300 = sshll.u32 %s293, 4
          %s301 = int_to_ptr.vmem [resolvable:$true] %s300
          %303 = dma.hbm_to_vmem [thread:$0]  %s298, 128, %s301, %s290
        $region44: #{tpu_custom_call.1} parent=39 // pred_fallthru
          _
      $region40: #{tpu_custom_call.1} parent=5 // pred_fallthru
        _
      %p304 = scmp.le.s32.totalorder 1, %s25
      %p305 = scmp.lt.s32.totalorder %s25, 3
      %p306 = pnand %p304, %p305
      %p307 = pneg %p306
      // Predicated region
      $region45: #{tpu_custom_call.1} parent=5 // pred_check
        _
      $region46: #{tpu_custom_call.1} parent=5 // pred_check_branch
        %309 = sbr.rel (%p306) target = $region48
      $region47: #{tpu_custom_call.1} parent=5 // pred_region
        %s310 = ssub.s32 %s25, 1
        %s311 = sand.u32 %s38, 1
        %s312 = scalar_lea.sflag [#allocation4], %s311
        %s313 = sand.u32 %s38, 1
        %s314 = smul.addr %s313, 8
        %s315 = scalar_lea.vmem [#allocation3], %s314
        // Predicated region
        $region49: #{tpu_custom_call.1} parent=47 // pred_check
          %p316 = pneg %p51
        $region50: #{tpu_custom_call.1} parent=47 // pred_check_branch
          %318 = sbr.rel (%p316) target = $region52
        $region51: #{tpu_custom_call.1} parent=47 // pred_region
          %319 = dma.done %s312, 128
        $region52: #{tpu_custom_call.1} parent=47 // pred_fallthru
          _
        // Predicated region
        $region53: #{tpu_custom_call.1} parent=47 // pred_check
          %p320 = pneg %p114
        $region54: #{tpu_custom_call.1} parent=47 // pred_check_branch
          %322 = sbr.rel (%p320) target = $region56
        $region55: #{tpu_custom_call.1} parent=47 // pred_region
          %323 = dma.done [#allocation7], 256
        $region56: #{tpu_custom_call.1} parent=47 // pred_fallthru
          _
        // Predicated region
        $region57: #{tpu_custom_call.1} parent=47 // pred_check
          %p324 = pneg %p156
        $region58: #{tpu_custom_call.1} parent=47 // pred_check_branch
          %326 = sbr.rel (%p324) target = $region60
        $region59: #{tpu_custom_call.1} parent=47 // pred_region
          %327 = dma.done [#allocation7], 256
        $region60: #{tpu_custom_call.1} parent=47 // pred_fallthru
          _
        %s328 = sand.u32 %s38, 1
        %s329 = scalar_lea.sflag [#allocation4], %s328
        %s330 = sand.u32 %s38, 1
        %s331 = smul.addr %s330, 8
        %s332 = scalar_lea.vmem [#allocation3], %s331
        %p333 = pneg %p51
        %p334 = pneg %p48
        %p335 = pneg %p72
        %p336 = pneg %p69
        %p337 = pneg %p93
        %p338 = pneg %p90
        %p339 = pneg %p114
        %p340 = pneg %p111
        %p341 = pneg %p135
        %p342 = pneg %p132
        %p343 = pneg %p156
        %p344 = pneg %p153
        %p345 = pneg %p177
        %p346 = pneg %p174
        %p347 = pneg %p203
        %p348 = pneg %p200
        %s349 = sand.u32 %s190, 1
        %s350 = scalar_lea.sflag [#allocation5], %s349
        %s351 = sand.u32 %s190, 1
        %s352 = smul.addr %s351, 8
        %s353 = scalar_lea.vmem [#allocation9], %s352
        %p354 = pneg %p229
        %p355 = pneg %p226
        %s356 = sand.u32 %s216, 1
        %s357 = scalar_lea.sflag [#allocation11], %s356
        %s358 = sand.u32 %s216, 1
        %s359 = smul.addr %s358, 8
        %s360 = scalar_lea.vmem [#allocation10], %s359
        %v362 = vld [vmem:[%s315] sm:$0xff]
        %vm363 = vcmask 261120
        %v364 = vsel %vm363, %v362, 0.0
        %365 = vadd.xlane.f32.xlu0 %v364
        %v366 = vpop.xlane.xlu0 %365
        %v367 = vrcp.pop 32.0
        %v368 = vmul.f32 %v366, %v367
        %v369 = vsub.f32 %v362, %v368
        %v370 = vmul.f32 %v369, %v369
        %v371 = vsel %vm363, %v370, 0.0
        %372 = vadd.xlane.f32.xlu0 %v371
        %v373 = vpop.xlane.xlu0 %372
        %v374 = vmul.f32 %v373, %v367
        %v375 = vadd.f32 %v374, 1e-05
        %v376 = vrsqrt.pop %v375
        %v377 = vmul.f32 %v369, %v376
        %v378 = vld [vmem:[%s1] sm:$0x1]
        %v380 = vlaneseq
        %v381 = vshrl.u32 %v380, 7
        %v382 = vsub.s32 0, %v381
        %v383 = vrot.slane %v378, %v382
        %v385 = vmul.f32 %v377, %v383
        %v386 = vld [vmem:[%s2] sm:$0x1]
        %v388 = vlaneseq
        %v389 = vshrl.u32 %v388, 7
        %v390 = vsub.s32 0, %v389
        %v391 = vrot.slane %v386, %v390
        %v393 = vadd.f32 %v385, %v391
        %v394 = vpack.c.bf16 %v393, %v393
        %v395 = vld [vmem:[#allocation6] sm:$0xf]
        %v396 = vld [vmem:[#allocation6 + $0x4] sm:$0xf]
        %v397 = vld [vmem:[#allocation6 + $0x8] sm:$0xf]
        %v398 = vld [vmem:[#allocation6 + $0xc] sm:$0xf]
        %v399 = vld [vmem:[%s4] sm:$0x1]
        %v401 = vlaneseq
        %v402 = vshrl.u32 %v401, 7
        %v403 = vsub.s32 0, %v402
        %v404 = vrot.slane %v399, %v403
        %v410 = vunpack.c.l.b16 %v395
        %v411 = vunpack.c.l.b16 %v396
        %v412 = vunpack.c.l.b16 %v397
        %v413 = vunpack.c.l.b16 %v398
        %v414 = vpack.c.b16 %v411, %v410
        %v415 = vpack.c.b16 %v413, %v412
        %v419 = vsel %vm363, %v394, 0
        %421 = vmatprep.subr.bf16.mxu0 0
        %422 = vmatpush1.bf16.msra.mxu0 0
        %423 = vmatprep.subr.bf16.mxu0 0
        %424 = vmatpush1.bf16.msra.mxu0 0
        %425 = vmatprep.subr.bf16.mxu0 0
        %426 = vmatpush1.bf16.msra.mxu0 0
        %427 = vmatprep.subr.bf16.mxu0 0
        %428 = vmatpush1.bf16.msra.mxu0 0
        %429 = vmatprep.subr.bf16.mxu0 0
        %430 = vmatpush1.bf16.msra.mxu0 0
        %431 = vmatprep.subr.bf16.mxu0 0
        %432 = vmatpush1.bf16.msra.mxu0 0
        %433 = vmatprep.subr.bf16.mxu0 0
        %434 = vmatpush1.bf16.msra.mxu0 %v415
        %435 = vmatprep.subr.bf16.mxu0 0
        %436 = vmatpush1.bf16.msra.mxu0 %v414
        %437 = vmatprep.subr.bf16.mxu0 0
        %438 = vmatpush2.bf16.msra.mxu0 0
        %439 = vmatprep.subr.bf16.mxu0 0
        %440 = vmatpush2.bf16.msra.mxu0 0
        %441 = vmatprep.subr.bf16.mxu0 0
        %442 = vmatpush2.bf16.msra.mxu0 0
        %443 = vmatprep.subr.bf16.mxu0 0
        %444 = vmatpush2.bf16.msra.mxu0 0
        %445 = vmatprep.subr.bf16.mxu0 0
        %446 = vmatpush2.bf16.msra.mxu0 0
        %447 = vmatprep.subr.bf16.mxu0 0
        %448 = vmatpush2.bf16.msra.mxu0 0
        %449 = vmatprep.subr.bf16.mxu0 0
        %450 = vmatpush2.bf16.msra.mxu0 0
        %451 = vmatprep.subr.bf16.mxu0 0
        %452 = vmatpush2.bf16.msra.mxu0 0
        %453 = vmatprep.mubr.bf16.mxu0 0
        %454 = vmatmul.mubr.bf16.gmra.mxu0 %v419
        %v455 = vpop.f32.mrf.mxu0
        %v456 = vadd.f32 %v404, %v455
        %v457 = vpop.f32.mrf.mxu0
        %v458 = vpop.f32.mrf.mxu0
        %v459 = vpop.f32.mrf.mxu0
        %460 = vdwg.mxu0
        %vm461 = vcmask 785408
        %462 = vst.msk [vmem:[%s360] sm:$0xff] %vm461, %v456
        %v463 = vmul.f32 %v456, 0.35355338
        %v464 = vpack.c.bf16 %v463, %v463
        %v465 = vpack.c.bf16 %v456, %v456
        %467 = vrot.lane.b32.xlu0 %v465, 96
        %v468 = vpop.permute.xlu0 %467
        %vm469 = vcmask 64512
        %v471 = vsel %vm469, %v464, 0
        %v474 = vsel %vm469, %v468, 0
        %476 = vmatprep.subr.bf16.mxu0 0
        %477 = vmatpush1.bf16.xpose.msra.mxu0 0
        %478 = vmatprep.subr.bf16.mxu0 0
        %479 = vmatpush1.bf16.xpose.msra.mxu0 0
        %480 = vmatprep.subr.bf16.mxu0 0
        %481 = vmatpush1.bf16.xpose.msra.mxu0 0
        %482 = vmatprep.subr.bf16.mxu0 0
        %483 = vmatpush1.bf16.xpose.msra.mxu0 0
        %484 = vmatprep.subr.bf16.mxu0 0
        %485 = vmatpush1.bf16.xpose.msra.mxu0 0
        %486 = vmatprep.subr.bf16.mxu0 0
        %487 = vmatpush1.bf16.xpose.msra.mxu0 0
        %488 = vmatprep.subr.bf16.mxu0 0
        %489 = vmatpush1.bf16.xpose.msra.mxu0 0
        %490 = vmatprep.subr.bf16.mxu0 0
        %491 = vmatpush1.bf16.xpose.msra.mxu0 %v474
        %492 = vmatprep.subr.bf16.mxu0 0
        %493 = vmatpush2.bf16.xpose.msra.mxu0 0
        %494 = vmatprep.subr.bf16.mxu0 0
        %495 = vmatpush2.bf16.xpose.msra.mxu0 0
        %496 = vmatprep.subr.bf16.mxu0 0
        %497 = vmatpush2.bf16.xpose.msra.mxu0 0
        %498 = vmatprep.subr.bf16.mxu0 0
        %499 = vmatpush2.bf16.xpose.msra.mxu0 0
        %500 = vmatprep.subr.bf16.mxu0 0
        %501 = vmatpush2.bf16.xpose.msra.mxu0 0
        %502 = vmatprep.subr.bf16.mxu0 0
        %503 = vmatpush2.bf16.xpose.msra.mxu0 0
        %504 = vmatprep.subr.bf16.mxu0 0
        %505 = vmatpush2.bf16.xpose.msra.mxu0 0
        %506 = vmatprep.subr.bf16.mxu0 0
        %507 = vmatpush2.bf16.xpose.msra.mxu0 0
        %508 = vmatprep.mubr.bf16.mxu0 0
        %509 = vmatmul.mubr.bf16.gmra.mxu0 %v471
        %v510 = vpop.f32.mrf.mxu0
        %v511 = vadd.f32 0.0, %v510
        %v512 = vpop.f32.mrf.mxu0
        %v513 = vpop.f32.mrf.mxu0
        %v514 = vpop.f32.mrf.mxu0
        %515 = vdwg.mxu0
        %v516 = vsel %vm469, %v511, -inf
        %517 = vmax.xlane.f32.xlu0 %v516
        %v518 = vpop.xlane.xlu0 %517
        %v519 = vsub.f32 %v511, %v518
        %v520 = vmul.f32 %v519, 1.442695
        %v521 = vpow.pop %v520
        %v522 = vsel %vm469, %v521, 0.0
        %523 = vadd.xlane.f32.xlu0 %v522
        %v524 = vpop.xlane.xlu0 %523
        %v525 = vrcp.pop %v524
        %v526 = vpack.c.bf16 %v521, %v521
        %527 = vrot.lane.b32.xlu0 %v465, 64
        %v528 = vpop.permute.xlu0 %527
        %v530 = vsel %vm469, %v526, 0
        %vm532 = vcmask 1043456
        %v534 = vsel %vm532, %v528, 0
        %536 = vmatprep.subr.bf16.mxu0 0
        %537 = vmatpush1.bf16.msra.mxu0 0
        %538 = vmatprep.subr.bf16.mxu0 0
        %539 = vmatpush1.bf16.msra.mxu0 0
        %540 = vmatprep.subr.bf16.mxu0 0
        %541 = vmatpush1.bf16.msra.mxu0 0
        %542 = vmatprep.subr.bf16.mxu0 0
        %543 = vmatpush1.bf16.msra.mxu0 0
        %544 = vmatprep.subr.bf16.mxu0 0
        %545 = vmatpush1.bf16.msra.mxu0 0
        %546 = vmatprep.subr.bf16.mxu0 0
        %547 = vmatpush1.bf16.msra.mxu0 0
        %548 = vmatprep.subr.bf16.mxu0 0
        %549 = vmatpush1.bf16.msra.mxu0 0
        %550 = vmatprep.subr.bf16.mxu0 0
        %551 = vmatpush1.bf16.msra.mxu0 %v534
        %552 = vmatprep.subr.bf16.mxu0 0
        %553 = vmatpush2.bf16.msra.mxu0 0
        %554 = vmatprep.subr.bf16.mxu0 0
        %555 = vmatpush2.bf16.msra.mxu0 0
        %556 = vmatprep.subr.bf16.mxu0 0
        %557 = vmatpush2.bf16.msra.mxu0 0
        %558 = vmatprep.subr.bf16.mxu0 0
        %559 = vmatpush2.bf16.msra.mxu0 0
        %560 = vmatprep.subr.bf16.mxu0 0
        %561 = vmatpush2.bf16.msra.mxu0 0
        %562 = vmatprep.subr.bf16.mxu0 0
        %563 = vmatpush2.bf16.msra.mxu0 0
        %564 = vmatprep.subr.bf16.mxu0 0
        %565 = vmatpush2.bf16.msra.mxu0 0
        %566 = vmatprep.subr.bf16.mxu0 0
        %567 = vmatpush2.bf16.msra.mxu0 0
        %568 = vmatprep.mubr.bf16.mxu0 0
        %569 = vmatmul.mubr.bf16.gmra.mxu0 %v530
        %v570 = vpop.f32.mrf.mxu0
        %v571 = vadd.f32 0.0, %v570
        %v572 = vpop.f32.mrf.mxu0
        %v573 = vpop.f32.mrf.mxu0
        %v574 = vpop.f32.mrf.mxu0
        %575 = vdwg.mxu0
        %v576 = vmul.f32 %v571, %v525
        %v577 = vpack.c.bf16 %v576, %v576
        %v578 = vld [vmem:[#allocation8] sm:$0xf]
        %v580 = vsel %vm469, %v577, 0
        %v583 = vsel %vm532, %v578, 0
        %585 = vmatprep.subr.bf16.mxu0 0
        %586 = vmatpush1.bf16.msra.mxu0 0
        %587 = vmatprep.subr.bf16.mxu0 0
        %588 = vmatpush1.bf16.msra.mxu0 0
        %589 = vmatprep.subr.bf16.mxu0 0
        %590 = vmatpush1.bf16.msra.mxu0 0
        %591 = vmatprep.subr.bf16.mxu0 0
        %592 = vmatpush1.bf16.msra.mxu0 0
        %593 = vmatprep.subr.bf16.mxu0 0
        %594 = vmatpush1.bf16.msra.mxu0 0
        %595 = vmatprep.subr.bf16.mxu0 0
        %596 = vmatpush1.bf16.msra.mxu0 0
        %597 = vmatprep.subr.bf16.mxu0 0
        %598 = vmatpush1.bf16.msra.mxu0 0
        %599 = vmatprep.subr.bf16.mxu0 0
        %600 = vmatpush1.bf16.msra.mxu0 %v583
        %601 = vmatprep.subr.bf16.mxu0 0
        %602 = vmatpush2.bf16.msra.mxu0 0
        %603 = vmatprep.subr.bf16.mxu0 0
        %604 = vmatpush2.bf16.msra.mxu0 0
        %605 = vmatprep.subr.bf16.mxu0 0
        %606 = vmatpush2.bf16.msra.mxu0 0
        %607 = vmatprep.subr.bf16.mxu0 0
        %608 = vmatpush2.bf16.msra.mxu0 0
        %609 = vmatprep.subr.bf16.mxu0 0
        %610 = vmatpush2.bf16.msra.mxu0 0
        %611 = vmatprep.subr.bf16.mxu0 0
        %612 = vmatpush2.bf16.msra.mxu0 0
        %613 = vmatprep.subr.bf16.mxu0 0
        %614 = vmatpush2.bf16.msra.mxu0 0
        %615 = vmatprep.subr.bf16.mxu0 0
        %616 = vmatpush2.bf16.msra.mxu0 0
        %617 = vmatprep.mubr.bf16.mxu0 0
        %618 = vmatmul.mubr.bf16.gmra.mxu0 %v580
        %v619 = vpop.f32.mrf.mxu0
        %v620 = vadd.f32 0.0, %v619
        %v621 = vpop.f32.mrf.mxu0
        %v622 = vpop.f32.mrf.mxu0
        %v623 = vpop.f32.mrf.mxu0
        %624 = vdwg.mxu0
        %625 = vst.msk [vmem:[#allocation2] sm:$0xff] %vm363, %v620
        %627 = vrot.lane.b32.xlu0 %v464, 120
        %v628 = vpop.permute.xlu0 %627
        %629 = vrot.lane.b32.xlu0 %v465, 88
        %v630 = vpop.permute.xlu0 %629
        %v632 = vsel %vm469, %v628, 0
        %v635 = vsel %vm469, %v630, 0
        %637 = vmatprep.subr.bf16.mxu0 0
        %638 = vmatpush1.bf16.xpose.msra.mxu0 0
        %639 = vmatprep.subr.bf16.mxu0 0
        %640 = vmatpush1.bf16.xpose.msra.mxu0 0
        %641 = vmatprep.subr.bf16.mxu0 0
        %642 = vmatpush1.bf16.xpose.msra.mxu0 0
        %643 = vmatprep.subr.bf16.mxu0 0
        %644 = vmatpush1.bf16.xpose.msra.mxu0 0
        %645 = vmatprep.subr.bf16.mxu0 0
        %646 = vmatpush1.bf16.xpose.msra.mxu0 0
        %647 = vmatprep.subr.bf16.mxu0 0
        %648 = vmatpush1.bf16.xpose.msra.mxu0 0
        %649 = vmatprep.subr.bf16.mxu0 0
        %650 = vmatpush1.bf16.xpose.msra.mxu0 0
        %651 = vmatprep.subr.bf16.mxu0 0
        %652 = vmatpush1.bf16.xpose.msra.mxu0 %v635
        %653 = vmatprep.subr.bf16.mxu0 0
        %654 = vmatpush2.bf16.xpose.msra.mxu0 0
        %655 = vmatprep.subr.bf16.mxu0 0
        %656 = vmatpush2.bf16.xpose.msra.mxu0 0
        %657 = vmatprep.subr.bf16.mxu0 0
        %658 = vmatpush2.bf16.xpose.msra.mxu0 0
        %659 = vmatprep.subr.bf16.mxu0 0
        %660 = vmatpush2.bf16.xpose.msra.mxu0 0
        %661 = vmatprep.subr.bf16.mxu0 0
        %662 = vmatpush2.bf16.xpose.msra.mxu0 0
        %663 = vmatprep.subr.bf16.mxu0 0
        %664 = vmatpush2.bf16.xpose.msra.mxu0 0
        %665 = vmatprep.subr.bf16.mxu0 0
        %666 = vmatpush2.bf16.xpose.msra.mxu0 0
        %667 = vmatprep.subr.bf16.mxu0 0
        %668 = vmatpush2.bf16.xpose.msra.mxu0 0
        %669 = vmatprep.mubr.bf16.mxu0 0
        %670 = vmatmul.mubr.bf16.gmra.mxu0 %v632
        %v671 = vpop.f32.mrf.mxu0
        %v672 = vadd.f32 0.0, %v671
        %v673 = vpop.f32.mrf.mxu0
        %v674 = vpop.f32.mrf.mxu0
        %v675 = vpop.f32.mrf.mxu0
        %676 = vdwg.mxu0
        %v677 = vsel %vm469, %v672, -inf
        %678 = vmax.xlane.f32.xlu0 %v677
        %v679 = vpop.xlane.xlu0 %678
        %v680 = vsub.f32 %v672, %v679
        %v681 = vmul.f32 %v680, 1.442695
        %v682 = vpow.pop %v681
        %v683 = vsel %vm469, %v682, 0.0
        %684 = vadd.xlane.f32.xlu0 %v683
        %v685 = vpop.xlane.xlu0 %684
        %v686 = vrcp.pop %v685
        %v687 = vpack.c.bf16 %v682, %v682
        %688 = vrot.lane.b32.xlu0 %v465, 56
        %v689 = vpop.permute.xlu0 %688
        %v691 = vsel %vm469, %v687, 0
        %v694 = vsel %vm532, %v689, 0
        %696 = vmatprep.subr.bf16.mxu0 0
        %697 = vmatpush1.bf16.msra.mxu0 0
        %698 = vmatprep.subr.bf16.mxu0 0
        %699 = vmatpush1.bf16.msra.mxu0 0
        %700 = vmatprep.subr.bf16.mxu0 0
        %701 = vmatpush1.bf16.msra.mxu0 0
        %702 = vmatprep.subr.bf16.mxu0 0
        %703 = vmatpush1.bf16.msra.mxu0 0
        %704 = vmatprep.subr.bf16.mxu0 0
        %705 = vmatpush1.bf16.msra.mxu0 0
        %706 = vmatprep.subr.bf16.mxu0 0
        %707 = vmatpush1.bf16.msra.mxu0 0
        %708 = vmatprep.subr.bf16.mxu0 0
        %709 = vmatpush1.bf16.msra.mxu0 0
        %710 = vmatprep.subr.bf16.mxu0 0
        %711 = vmatpush1.bf16.msra.mxu0 %v694
        %712 = vmatprep.subr.bf16.mxu0 0
        %713 = vmatpush2.bf16.msra.mxu0 0
        %714 = vmatprep.subr.bf16.mxu0 0
        %715 = vmatpush2.bf16.msra.mxu0 0
        %716 = vmatprep.subr.bf16.mxu0 0
        %717 = vmatpush2.bf16.msra.mxu0 0
        %718 = vmatprep.subr.bf16.mxu0 0
        %719 = vmatpush2.bf16.msra.mxu0 0
        %720 = vmatprep.subr.bf16.mxu0 0
        %721 = vmatpush2.bf16.msra.mxu0 0
        %722 = vmatprep.subr.bf16.mxu0 0
        %723 = vmatpush2.bf16.msra.mxu0 0
        %724 = vmatprep.subr.bf16.mxu0 0
        %725 = vmatpush2.bf16.msra.mxu0 0
        %726 = vmatprep.subr.bf16.mxu0 0
        %727 = vmatpush2.bf16.msra.mxu0 0
        %728 = vmatprep.mubr.bf16.mxu0 0
        %729 = vmatmul.mubr.bf16.gmra.mxu0 %v691
        %v730 = vpop.f32.mrf.mxu0
        %v731 = vadd.f32 0.0, %v730
        %v732 = vpop.f32.mrf.mxu0
        %v733 = vpop.f32.mrf.mxu0
        %v734 = vpop.f32.mrf.mxu0
        %735 = vdwg.mxu0
        %v736 = vmul.f32 %v731, %v686
        %v737 = vpack.c.bf16 %v736, %v736
        %v738 = vld [vmem:[#allocation8 + $0x4] sm:$0xf]
        %v740 = vsel %vm469, %v737, 0
        %v743 = vsel %vm532, %v738, 0
        %745 = vmatprep.subr.bf16.mxu0 0
        %746 = vmatpush1.bf16.msra.mxu0 0
        %747 = vmatprep.subr.bf16.mxu0 0
        %748 = vmatpush1.bf16.msra.mxu0 0
        %749 = vmatprep.subr.bf16.mxu0 0
        %750 = vmatpush1.bf16.msra.mxu0 0
        %751 = vmatprep.subr.bf16.mxu0 0
        %752 = vmatpush1.bf16.msra.mxu0 0
        %753 = vmatprep.subr.bf16.mxu0 0
        %754 = vmatpush1.bf16.msra.mxu0 0
        %755 = vmatprep.subr.bf16.mxu0 0
        %756 = vmatpush1.bf16.msra.mxu0 0
        %757 = vmatprep.subr.bf16.mxu0 0
        %758 = vmatpush1.bf16.msra.mxu0 0
        %759 = vmatprep.subr.bf16.mxu0 0
        %760 = vmatpush1.bf16.msra.mxu0 %v743
        %761 = vmatprep.subr.bf16.mxu0 0
        %762 = vmatpush2.bf16.msra.mxu0 0
        %763 = vmatprep.subr.bf16.mxu0 0
        %764 = vmatpush2.bf16.msra.mxu0 0
        %765 = vmatprep.subr.bf16.mxu0 0
        %766 = vmatpush2.bf16.msra.mxu0 0
        %767 = vmatprep.subr.bf16.mxu0 0
        %768 = vmatpush2.bf16.msra.mxu0 0
        %769 = vmatprep.subr.bf16.mxu0 0
        %770 = vmatpush2.bf16.msra.mxu0 0
        %771 = vmatprep.subr.bf16.mxu0 0
        %772 = vmatpush2.bf16.msra.mxu0 0
        %773 = vmatprep.subr.bf16.mxu0 0
        %774 = vmatpush2.bf16.msra.mxu0 0
        %775 = vmatprep.subr.bf16.mxu0 0
        %776 = vmatpush2.bf16.msra.mxu0 0
        %777 = vmatprep.mubr.bf16.mxu0 0
        %778 = vmatmul.mubr.bf16.gmra.mxu0 %v740
        %v779 = vpop.f32.mrf.mxu0
        %v780 = vadd.f32 0.0, %v779
        %v781 = vpop.f32.mrf.mxu0
        %v782 = vpop.f32.mrf.mxu0
        %v783 = vpop.f32.mrf.mxu0
        %784 = vdwg.mxu0
        %v785 = vld [vmem:[#allocation2] sm:$0xff]
        %v786 = vadd.f32 %v785, %v780
        %787 = vst.msk [vmem:[#allocation2] sm:$0xff] %vm363, %v786
        %788 = vrot.lane.b32.xlu0 %v464, 112
        %v789 = vpop.permute.xlu0 %788
        %790 = vrot.lane.b32.xlu0 %v465, 80
        %v791 = vpop.permute.xlu0 %790
        %v793 = vsel %vm469, %v789, 0
        %v796 = vsel %vm469, %v791, 0
        %798 = vmatprep.subr.bf16.mxu0 0
        %799 = vmatpush1.bf16.xpose.msra.mxu0 0
        %800 = vmatprep.subr.bf16.mxu0 0
        %801 = vmatpush1.bf16.xpose.msra.mxu0 0
        %802 = vmatprep.subr.bf16.mxu0 0
        %803 = vmatpush1.bf16.xpose.msra.mxu0 0
        %804 = vmatprep.subr.bf16.mxu0 0
        %805 = vmatpush1.bf16.xpose.msra.mxu0 0
        %806 = vmatprep.subr.bf16.mxu0 0
        %807 = vmatpush1.bf16.xpose.msra.mxu0 0
        %808 = vmatprep.subr.bf16.mxu0 0
        %809 = vmatpush1.bf16.xpose.msra.mxu0 0
        %810 = vmatprep.subr.bf16.mxu0 0
        %811 = vmatpush1.bf16.xpose.msra.mxu0 0
        %812 = vmatprep.subr.bf16.mxu0 0
        %813 = vmatpush1.bf16.xpose.msra.mxu0 %v796
        %814 = vmatprep.subr.bf16.mxu0 0
        %815 = vmatpush2.bf16.xpose.msra.mxu0 0
        %816 = vmatprep.subr.bf16.mxu0 0
        %817 = vmatpush2.bf16.xpose.msra.mxu0 0
        %818 = vmatprep.subr.bf16.mxu0 0
        %819 = vmatpush2.bf16.xpose.msra.mxu0 0
        %820 = vmatprep.subr.bf16.mxu0 0
        %821 = vmatpush2.bf16.xpose.msra.mxu0 0
        %822 = vmatprep.subr.bf16.mxu0 0
        %823 = vmatpush2.bf16.xpose.msra.mxu0 0
        %824 = vmatprep.subr.bf16.mxu0 0
        %825 = vmatpush2.bf16.xpose.msra.mxu0 0
        %826 = vmatprep.subr.bf16.mxu0 0
        %827 = vmatpush2.bf16.xpose.msra.mxu0 0
        %828 = vmatprep.subr.bf16.mxu0 0
        %829 = vmatpush2.bf16.xpose.msra.mxu0 0
        %830 = vmatprep.mubr.bf16.mxu0 0
        %831 = vmatmul.mubr.bf16.gmra.mxu0 %v793
        %v832 = vpop.f32.mrf.mxu0
        %v833 = vadd.f32 0.0, %v832
        %v834 = vpop.f32.mrf.mxu0
        %v835 = vpop.f32.mrf.mxu0
        %v836 = vpop.f32.mrf.mxu0
        %837 = vdwg.mxu0
        %v838 = vsel %vm469, %v833, -inf
        %839 = vmax.xlane.f32.xlu0 %v838
        %v840 = vpop.xlane.xlu0 %839
        %v841 = vsub.f32 %v833, %v840
        %v842 = vmul.f32 %v841, 1.442695
        %v843 = vpow.pop %v842
        %v844 = vsel %vm469, %v843, 0.0
        %845 = vadd.xlane.f32.xlu0 %v844
        %v846 = vpop.xlane.xlu0 %845
        %v847 = vrcp.pop %v846
        %v848 = vpack.c.bf16 %v843, %v843
        %849 = vrot.lane.b32.xlu0 %v465, 48
        %v850 = vpop.permute.xlu0 %849
        %v852 = vsel %vm469, %v848, 0
        %v855 = vsel %vm532, %v850, 0
        %857 = vmatprep.subr.bf16.mxu0 0
        %858 = vmatpush1.bf16.msra.mxu0 0
        %859 = vmatprep.subr.bf16.mxu0 0
        %860 = vmatpush1.bf16.msra.mxu0 0
        %861 = vmatprep.subr.bf16.mxu0 0
        %862 = vmatpush1.bf16.msra.mxu0 0
        %863 = vmatprep.subr.bf16.mxu0 0
        %864 = vmatpush1.bf16.msra.mxu0 0
        %865 = vmatprep.subr.bf16.mxu0 0
        %866 = vmatpush1.bf16.msra.mxu0 0
        %867 = vmatprep.subr.bf16.mxu0 0
        %868 = vmatpush1.bf16.msra.mxu0 0
        %869 = vmatprep.subr.bf16.mxu0 0
        %870 = vmatpush1.bf16.msra.mxu0 0
        %871 = vmatprep.subr.bf16.mxu0 0
        %872 = vmatpush1.bf16.msra.mxu0 %v855
        %873 = vmatprep.subr.bf16.mxu0 0
        %874 = vmatpush2.bf16.msra.mxu0 0
        %875 = vmatprep.subr.bf16.mxu0 0
        %876 = vmatpush2.bf16.msra.mxu0 0
        %877 = vmatprep.subr.bf16.mxu0 0
        %878 = vmatpush2.bf16.msra.mxu0 0
        %879 = vmatprep.subr.bf16.mxu0 0
        %880 = vmatpush2.bf16.msra.mxu0 0
        %881 = vmatprep.subr.bf16.mxu0 0
        %882 = vmatpush2.bf16.msra.mxu0 0
        %883 = vmatprep.subr.bf16.mxu0 0
        %884 = vmatpush2.bf16.msra.mxu0 0
        %885 = vmatprep.subr.bf16.mxu0 0
        %886 = vmatpush2.bf16.msra.mxu0 0
        %887 = vmatprep.subr.bf16.mxu0 0
        %888 = vmatpush2.bf16.msra.mxu0 0
        %889 = vmatprep.mubr.bf16.mxu0 0
        %890 = vmatmul.mubr.bf16.gmra.mxu0 %v852
        %v891 = vpop.f32.mrf.mxu0
        %v892 = vadd.f32 0.0, %v891
        %v893 = vpop.f32.mrf.mxu0
        %v894 = vpop.f32.mrf.mxu0
        %v895 = vpop.f32.mrf.mxu0
        %896 = vdwg.mxu0
        %v897 = vmul.f32 %v892, %v847
        %v898 = vpack.c.bf16 %v897, %v897
        %v899 = vld [vmem:[#allocation8 + $0x8] sm:$0xf]
        %v901 = vsel %vm469, %v898, 0
        %v904 = vsel %vm532, %v899, 0
        %906 = vmatprep.subr.bf16.mxu0 0
        %907 = vmatpush1.bf16.msra.mxu0 0
        %908 = vmatprep.subr.bf16.mxu0 0
        %909 = vmatpush1.bf16.msra.mxu0 0
        %910 = vmatprep.subr.bf16.mxu0 0
        %911 = vmatpush1.bf16.msra.mxu0 0
        %912 = vmatprep.subr.bf16.mxu0 0
        %913 = vmatpush1.bf16.msra.mxu0 0
        %914 = vmatprep.subr.bf16.mxu0 0
        %915 = vmatpush1.bf16.msra.mxu0 0
        %916 = vmatprep.subr.bf16.mxu0 0
        %917 = vmatpush1.bf16.msra.mxu0 0
        %918 = vmatprep.subr.bf16.mxu0 0
        %919 = vmatpush1.bf16.msra.mxu0 0
        %920 = vmatprep.subr.bf16.mxu0 0
        %921 = vmatpush1.bf16.msra.mxu0 %v904
        %922 = vmatprep.subr.bf16.mxu0 0
        %923 = vmatpush2.bf16.msra.mxu0 0
        %924 = vmatprep.subr.bf16.mxu0 0
        %925 = vmatpush2.bf16.msra.mxu0 0
        %926 = vmatprep.subr.bf16.mxu0 0
        %927 = vmatpush2.bf16.msra.mxu0 0
        %928 = vmatprep.subr.bf16.mxu0 0
        %929 = vmatpush2.bf16.msra.mxu0 0
        %930 = vmatprep.subr.bf16.mxu0 0
        %931 = vmatpush2.bf16.msra.mxu0 0
        %932 = vmatprep.subr.bf16.mxu0 0
        %933 = vmatpush2.bf16.msra.mxu0 0
        %934 = vmatprep.subr.bf16.mxu0 0
        %935 = vmatpush2.bf16.msra.mxu0 0
        %936 = vmatprep.subr.bf16.mxu0 0
        %937 = vmatpush2.bf16.msra.mxu0 0
        %938 = vmatprep.mubr.bf16.mxu0 0
        %939 = vmatmul.mubr.bf16.gmra.mxu0 %v901
        %v940 = vpop.f32.mrf.mxu0
        %v941 = vadd.f32 0.0, %v940
        %v942 = vpop.f32.mrf.mxu0
        %v943 = vpop.f32.mrf.mxu0
        %v944 = vpop.f32.mrf.mxu0
        %945 = vdwg.mxu0
        %v946 = vld [vmem:[#allocation2] sm:$0xff]
        %v947 = vadd.f32 %v946, %v941
        %948 = vst.msk [vmem:[#allocation2] sm:$0xff] %vm363, %v947
        %949 = vrot.lane.b32.xlu0 %v464, 104
        %v950 = vpop.permute.xlu0 %949
        %951 = vrot.lane.b32.xlu0 %v465, 72
        %v952 = vpop.permute.xlu0 %951
        %v954 = vsel %vm469, %v950, 0
        %v957 = vsel %vm469, %v952, 0
        %959 = vmatprep.subr.bf16.mxu0 0
        %960 = vmatpush1.bf16.xpose.msra.mxu0 0
        %961 = vmatprep.subr.bf16.mxu0 0
        %962 = vmatpush1.bf16.xpose.msra.mxu0 0
        %963 = vmatprep.subr.bf16.mxu0 0
        %964 = vmatpush1.bf16.xpose.msra.mxu0 0
        %965 = vmatprep.subr.bf16.mxu0 0
        %966 = vmatpush1.bf16.xpose.msra.mxu0 0
        %967 = vmatprep.subr.bf16.mxu0 0
        %968 = vmatpush1.bf16.xpose.msra.mxu0 0
        %969 = vmatprep.subr.bf16.mxu0 0
        %970 = vmatpush1.bf16.xpose.msra.mxu0 0
        %971 = vmatprep.subr.bf16.mxu0 0
        %972 = vmatpush1.bf16.xpose.msra.mxu0 0
        %973 = vmatprep.subr.bf16.mxu0 0
        %974 = vmatpush1.bf16.xpose.msra.mxu0 %v957
        %975 = vmatprep.subr.bf16.mxu0 0
        %976 = vmatpush2.bf16.xpose.msra.mxu0 0
        %977 = vmatprep.subr.bf16.mxu0 0
        %978 = vmatpush2.bf16.xpose.msra.mxu0 0
        %979 = vmatprep.subr.bf16.mxu0 0
        %980 = vmatpush2.bf16.xpose.msra.mxu0 0
        %981 = vmatprep.subr.bf16.mxu0 0
        %982 = vmatpush2.bf16.xpose.msra.mxu0 0
        %983 = vmatprep.subr.bf16.mxu0 0
        %984 = vmatpush2.bf16.xpose.msra.mxu0 0
        %985 = vmatprep.subr.bf16.mxu0 0
        %986 = vmatpush2.bf16.xpose.msra.mxu0 0
        %987 = vmatprep.subr.bf16.mxu0 0
        %988 = vmatpush2.bf16.xpose.msra.mxu0 0
        %989 = vmatprep.subr.bf16.mxu0 0
        %990 = vmatpush2.bf16.xpose.msra.mxu0 0
        %991 = vmatprep.mubr.bf16.mxu0 0
        %992 = vmatmul.mubr.bf16.gmra.mxu0 %v954
        %v993 = vpop.f32.mrf.mxu0
        %v994 = vadd.f32 0.0, %v993
        %v995 = vpop.f32.mrf.mxu0
        %v996 = vpop.f32.mrf.mxu0
        %v997 = vpop.f32.mrf.mxu0
        %998 = vdwg.mxu0
        %v999 = vsel %vm469, %v994, -inf
        %1000 = vmax.xlane.f32.xlu0 %v999
        %v1001 = vpop.xlane.xlu0 %1000
        %v1002 = vsub.f32 %v994, %v1001
        %v1003 = vmul.f32 %v1002, 1.442695
        %v1004 = vpow.pop %v1003
        %v1005 = vsel %vm469, %v1004, 0.0
        %1006 = vadd.xlane.f32.xlu0 %v1005
        %v1007 = vpop.xlane.xlu0 %1006
        %v1008 = vrcp.pop %v1007
        %v1009 = vpack.c.bf16 %v1004, %v1004
        %1010 = vrot.lane.b32.xlu0 %v465, 40
        %v1011 = vpop.permute.xlu0 %1010
        %v1013 = vsel %vm469, %v1009, 0
        %v1016 = vsel %vm532, %v1011, 0
        %1018 = vmatprep.subr.bf16.mxu0 0
        %1019 = vmatpush1.bf16.msra.mxu0 0
        %1020 = vmatprep.subr.bf16.mxu0 0
        %1021 = vmatpush1.bf16.msra.mxu0 0
        %1022 = vmatprep.subr.bf16.mxu0 0
        %1023 = vmatpush1.bf16.msra.mxu0 0
        %1024 = vmatprep.subr.bf16.mxu0 0
        %1025 = vmatpush1.bf16.msra.mxu0 0
        %1026 = vmatprep.subr.bf16.mxu0 0
        %1027 = vmatpush1.bf16.msra.mxu0 0
        %1028 = vmatprep.subr.bf16.mxu0 0
        %1029 = vmatpush1.bf16.msra.mxu0 0
        %1030 = vmatprep.subr.bf16.mxu0 0
        %1031 = vmatpush1.bf16.msra.mxu0 0
        %1032 = vmatprep.subr.bf16.mxu0 0
        %1033 = vmatpush1.bf16.msra.mxu0 %v1016
        %1034 = vmatprep.subr.bf16.mxu0 0
        %1035 = vmatpush2.bf16.msra.mxu0 0
        %1036 = vmatprep.subr.bf16.mxu0 0
        %1037 = vmatpush2.bf16.msra.mxu0 0
        %1038 = vmatprep.subr.bf16.mxu0 0
        %1039 = vmatpush2.bf16.msra.mxu0 0
        %1040 = vmatprep.subr.bf16.mxu0 0
        %1041 = vmatpush2.bf16.msra.mxu0 0
        %1042 = vmatprep.subr.bf16.mxu0 0
        %1043 = vmatpush2.bf16.msra.mxu0 0
        %1044 = vmatprep.subr.bf16.mxu0 0
        %1045 = vmatpush2.bf16.msra.mxu0 0
        %1046 = vmatprep.subr.bf16.mxu0 0
        %1047 = vmatpush2.bf16.msra.mxu0 0
        %1048 = vmatprep.subr.bf16.mxu0 0
        %1049 = vmatpush2.bf16.msra.mxu0 0
        %1050 = vmatprep.mubr.bf16.mxu0 0
        %1051 = vmatmul.mubr.bf16.gmra.mxu0 %v1013
        %v1052 = vpop.f32.mrf.mxu0
        %v1053 = vadd.f32 0.0, %v1052
        %v1054 = vpop.f32.mrf.mxu0
        %v1055 = vpop.f32.mrf.mxu0
        %v1056 = vpop.f32.mrf.mxu0
        %1057 = vdwg.mxu0
        %v1058 = vmul.f32 %v1053, %v1008
        %v1059 = vpack.c.bf16 %v1058, %v1058
        %v1060 = vld [vmem:[#allocation8 + $0xc] sm:$0xf]
        %v1062 = vsel %vm469, %v1059, 0
        %v1065 = vsel %vm532, %v1060, 0
        %1067 = vmatprep.subr.bf16.mxu0 0
        %1068 = vmatpush1.bf16.msra.mxu0 0
        %1069 = vmatprep.subr.bf16.mxu0 0
        %1070 = vmatpush1.bf16.msra.mxu0 0
        %1071 = vmatprep.subr.bf16.mxu0 0
        %1072 = vmatpush1.bf16.msra.mxu0 0
        %1073 = vmatprep.subr.bf16.mxu0 0
        %1074 = vmatpush1.bf16.msra.mxu0 0
        %1075 = vmatprep.subr.bf16.mxu0 0
        %1076 = vmatpush1.bf16.msra.mxu0 0
        %1077 = vmatprep.subr.bf16.mxu0 0
        %1078 = vmatpush1.bf16.msra.mxu0 0
        %1079 = vmatprep.subr.bf16.mxu0 0
        %1080 = vmatpush1.bf16.msra.mxu0 0
        %1081 = vmatprep.subr.bf16.mxu0 0
        %1082 = vmatpush1.bf16.msra.mxu0 %v1065
        %1083 = vmatprep.subr.bf16.mxu0 0
        %1084 = vmatpush2.bf16.msra.mxu0 0
        %1085 = vmatprep.subr.bf16.mxu0 0
        %1086 = vmatpush2.bf16.msra.mxu0 0
        %1087 = vmatprep.subr.bf16.mxu0 0
        %1088 = vmatpush2.bf16.msra.mxu0 0
        %1089 = vmatprep.subr.bf16.mxu0 0
        %1090 = vmatpush2.bf16.msra.mxu0 0
        %1091 = vmatprep.subr.bf16.mxu0 0
        %1092 = vmatpush2.bf16.msra.mxu0 0
        %1093 = vmatprep.subr.bf16.mxu0 0
        %1094 = vmatpush2.bf16.msra.mxu0 0
        %1095 = vmatprep.subr.bf16.mxu0 0
        %1096 = vmatpush2.bf16.msra.mxu0 0
        %1097 = vmatprep.subr.bf16.mxu0 0
        %1098 = vmatpush2.bf16.msra.mxu0 0
        %1099 = vmatprep.mubr.bf16.mxu0 0
        %1100 = vmatmul.mubr.bf16.gmra.mxu0 %v1062
        %v1101 = vpop.f32.mrf.mxu0
        %v1102 = vadd.f32 0.0, %v1101
        %v1103 = vpop.f32.mrf.mxu0
        %v1104 = vpop.f32.mrf.mxu0
        %v1105 = vpop.f32.mrf.mxu0
        %1106 = vdwg.mxu0
        %v1107 = vld [vmem:[#allocation2] sm:$0xff]
        %v1108 = vadd.f32 %v1107, %v1102
        %1109 = vst.msk [vmem:[#allocation2] sm:$0xff] %vm363, %v1108
        %v1110 = vld [vmem:[#allocation2] sm:$0xff]
        %v1111 = vld [vmem:[%s6] sm:$0x1]
        %v1113 = vlaneseq
        %v1114 = vshrl.u32 %v1113, 7
        %v1115 = vsub.s32 0, %v1114
        %v1116 = vrot.slane %v1111, %v1115
        %v1118 = vadd.f32 %v1110, %v1116
        %v1119 = vadd.f32 %v1118, %v362
        %1120 = vst.msk [vmem:[%s353] sm:$0xff] %vm363, %v1119
        %s1121 = sand.u32 %s190, 1
        %s1122 = scalar_lea.sflag [#allocation5], %s1121
        %s1123 = sand.u32 %s190, 1
        %s1124 = smul.addr %s1123, 8
        %s1125 = scalar_lea.vmem [#allocation9], %s1124
        %s1126 = sand.u32 %s216, 1
        %s1127 = scalar_lea.sflag [#allocation11], %s1126
        %s1128 = sand.u32 %s216, 1
        %s1129 = smul.addr %s1128, 8
        %s1130 = scalar_lea.vmem [#allocation10], %s1129
        // Predicated region
        $region61: #{tpu_custom_call.1} parent=47 // pred_check
          %p1131 = pneg %p200
        $region62: #{tpu_custom_call.1} parent=47 // pred_check_branch
          %1133 = sbr.rel (%p1131) target = $region64
        $region63: #{tpu_custom_call.1} parent=47 // pred_region
          %s1135 = ssub.s32 128, 128
          %1136 = vsyncadd %s1122, %s1135
          %s1137 = smul.addr %s30, 128
          %s1138 = scalar_lea.hbm %s7, %s1137
          %s1140 = sshll.u32 %s1125, 4
          %s1141 = int_to_ptr.vmem [resolvable:$true] %s1140
          %1143 = dma.vmem_to_hbm [thread:$0]  %s1141, 128, %s1138, %s1122
        $region64: #{tpu_custom_call.1} parent=47 // pred_fallthru
          _
        // Predicated region
        $region65: #{tpu_custom_call.1} parent=47 // pred_check
          %p1144 = pneg %p226
        $region66: #{tpu_custom_call.1} parent=47 // pred_check_branch
          %1146 = sbr.rel (%p1144) target = $region68
        $region67: #{tpu_custom_call.1} parent=47 // pred_region
          %s1148 = ssub.s32 128, 128
          %1149 = vsyncadd %s1127, %s1148
          %s1150 = smul.addr %s30, 128
          %s1151 = scalar_lea.hbm %s8, %s1150
          %s1153 = sshll.u32 %s1130, 4
          %s1154 = int_to_ptr.vmem [resolvable:$true] %s1153
          %1156 = dma.vmem_to_hbm [thread:$0]  %s1154, 128, %s1151, %s1127
        $region68: #{tpu_custom_call.1} parent=47 // pred_fallthru
          _
      $region48: #{tpu_custom_call.1} parent=5 // pred_fallthru
        _
      %p1157 = scmp.le.s32.totalorder 2, %s25
      // Predicated region
      $region69: #{tpu_custom_call.1} parent=5 // pred_check
        %p1158 = pneg %p1157
      $region70: #{tpu_custom_call.1} parent=5 // pred_check_branch
        %1160 = sbr.rel (%p1158) target = $region72
      $region71: #{tpu_custom_call.1} parent=5 // pred_region
        %s1161 = ssub.s32 %s25, 2
        // Predicated region
        $region73: #{tpu_custom_call.1} parent=71 // pred_check
          %p1162 = pneg %p206
        $region74: #{tpu_custom_call.1} parent=71 // pred_check_branch
          %1164 = sbr.rel (%p1162) target = $region76
        $region75: #{tpu_custom_call.1} parent=71 // pred_region
          %s1165 = sand.u32 %s191, 1
          %s1166 = scalar_lea.sflag [#allocation5], %s1165
          %s1167 = sand.u32 %s191, 1
          %s1168 = smul.addr %s1167, 8
          %s1169 = scalar_lea.vmem [#allocation9], %s1168
          %1170 = dma.done %s1166, 128
        $region76: #{tpu_custom_call.1} parent=71 // pred_fallthru
          _
        // Predicated region
        $region77: #{tpu_custom_call.1} parent=71 // pred_check
          %p1171 = pneg %p232
        $region78: #{tpu_custom_call.1} parent=71 // pred_check_branch
          %1173 = sbr.rel (%p1171) target = $region80
        $region79: #{tpu_custom_call.1} parent=71 // pred_region
          %s1174 = sand.u32 %s217, 1
          %s1175 = scalar_lea.sflag [#allocation11], %s1174
          %s1176 = sand.u32 %s217, 1
          %s1177 = smul.addr %s1176, 8
          %s1178 = scalar_lea.vmem [#allocation10], %s1177
          %1179 = dma.done %s1175, 128
        $region80: #{tpu_custom_call.1} parent=71 // pred_fallthru
          _
      $region72: #{tpu_custom_call.1} parent=5 // pred_fallthru
        _
    $region6: #{tpu_custom_call.1} parent=1 // loop_footer
      %s29 = sadd.s32 1, %s25
    $region7: #{tpu_custom_call.1} parent=1 // loop_footer_branch
      %24 = sbr.rel target = $region3
    $region8: #{tpu_custom_call.1} parent=1 // loop_exit
      _
    %1180 = vsyncpa [#allocation4], 1
    %s1181 = scalar_lea.sflag [#allocation4], 1
    %1182 = vsyncpa %s1181, 1
    %1183 = vsyncpa [#allocation7], 1
    %1184 = vsyncpa [#allocation5], 1
    %s1185 = scalar_lea.sflag [#allocation5], 1
    %1186 = vsyncpa %s1185, 1
    %1187 = vsyncpa [#allocation11], 1
    %s1188 = scalar_lea.sflag [#allocation11], 1
    %1189 = vsyncpa %s1188, 1

</llo_original>
